<compile_context>
chip_gen: v7x
topology: tpu7x:2x2x1
jax: 0.10.0
libtpu: 0.0.40
codegen_flags: <defaults>
</compile_context>

<pallas_src>
import math

import jax
import jax.numpy as jnp
from jax.experimental import pallas as pl
from jax.experimental.pallas import tpu as pltpu


# ----------------------------- Pallas kernel --------------------------------


def _make_seq2seq_kernel(seq_len):
    """Fused kernel, closed over the (static) true source length."""

    def kernel(src_ref, x0_ref, ewih_ref, ewhh_ref, decw_ref, wfc_ref, bfc_ref,
               out_ref, h_scr, c_scr):
        ti = pl.program_id(1)
        n_t = pl.num_programs(1)

        tc, bc, ep1 = src_ref.shape          # time-chunk, batch-chunk, emb(+1)
        hp = h_scr.shape[1]

        @pl.when(ti == 0)
        def _():
            h_scr[...] = jnp.zeros_like(h_scr)
            c_scr[...] = jnp.zeros_like(c_scr)

        # Hoisted input projection for the whole chunk: ONE MXU matmul.
        # Encoder bias is folded into the ones-column row of ewih, so the
        # result comes straight off the MXU (no broadcast-add pass).
        gx = jnp.dot(src_ref[...].reshape(tc * bc, ep1), ewih_ref[...],
                     preferred_element_type=jnp.float32)     # (tc*bc, 4hp) f32

        def lstm_cell(gates, c):
            # PyTorch gate order (i, f, g, o); each gate is a 128-lane block.
            i_g = jax.nn.sigmoid(gates[:, 0 * hp:1 * hp])
            f_g = jax.nn.sigmoid(gates[:, 1 * hp:2 * hp])
            g_g = jnp.tanh(gates[:, 2 * hp:3 * hp])
            o_g = jax.nn.sigmoid(gates[:, 3 * hp:4 * hp])
            c_new = f_g * c + i_g * g_g
            h_new = o_g * jnp.tanh(c_new)
            return h_new, c_new

        h = h_scr[...]
        c = c_scr[...]
        # Bounded unroll: only `tc` (<=8) steps per kernel invocation; the
        # gx slice offsets are Python-static and sublane-aligned (bc % 8 == 0).
        # TODO(synk): keep ewhh resident in MXU weight registers across steps
        #   via pltpu.matmul_push_rhs / matmul_acc_lhs / matmul_pop.
        masked_tail = (seq_len % tc) != 0
        for t in range(tc):
            gates = (gx[t * bc:(t + 1) * bc, :]
                     + jnp.dot(h.astype(ewhh_ref.dtype), ewhh_ref[...],
                               preferred_element_type=jnp.float32))
            h_new, c_new = lstm_cell(gates, c)
            if masked_tail:
                valid = (ti * tc + t) < seq_len   # skip padded time steps
                h = jnp.where(valid, h_new, h)
                c = jnp.where(valid, c_new, c)
            else:
                h, c = h_new, c_new
        h_scr[...] = h
        c_scr[...] = c

        @pl.when(ti == n_t - 1)
        def _():
            # Fused single decoder LSTM step (one stacked matmul; decoder bias
            # folded into the ones-column row of decw) + FC vocab projection.
            xh = jnp.concatenate([x0_ref[...], h.astype(decw_ref.dtype)],
                                 axis=1)                       # (bc, ep1+hp)
            gates = jnp.dot(xh, decw_ref[...],
                            preferred_element_type=jnp.float32)
            h2, _ = lstm_cell(gates, c)
            # TODO(synk): at large vocab, stream wfc in (hp, Vt) tiles instead
            #   of one (hp, Vp) block.
            out_ref[...] = (jnp.dot(h2.astype(wfc_ref.dtype), wfc_ref[...],
                                    preferred_element_type=jnp.float32)
                            + bfc_ref[...])

    return kernel


# ------------------------------ JAX wrappers --------------------------------


def _round_up(x, m):
    return (x + m - 1) // m * m


def _pad_axis(a, axis, new):
    pad = [(0, 0)] * a.ndim
    pad[axis] = (0, new - a.shape[axis])
    return jnp.pad(a, pad)


def _pad_gate_cols(w, h, hp):
    """(..., 4h) -> (..., 4*hp) zero-padding per gate block (i,f,g,o)."""
    lead = w.shape[:-1]
    w = w.reshape(*lead, 4, h)
    w = _pad_axis(w, w.ndim - 1, hp)
    return w.reshape(*lead, 4 * hp)


def _prepare_padded_params(params, e, h, ep1, hp, vp):
    bf16 = jnp.bfloat16

    def pad_emb(tab):
        t = _pad_axis(tab.astype(jnp.float32), 1, ep1)
        return t.at[:, e].set(1.0).astype(bf16)   # ones column -> bias folding

    # Encoder input weight with the encoder bias folded in as row `e`.
    ewih = _pad_axis(params["enc_wih"], 0, ep1)
    ewih = ewih.at[e, :].set(params["enc_b"][0])
    ewih = _pad_gate_cols(ewih, h, hp).astype(bf16)

    ewhh = _pad_gate_cols(_pad_axis(params["enc_whh"], 0, hp), h, hp).astype(bf16)

    # Decoder: stack [wih (bias folded at row e); whh] -> one (ep1+hp, 4hp) matmul.
    dwih = _pad_axis(params["dec_wih"], 0, ep1)
    dwih = dwih.at[e, :].set(params["dec_b"][0])
    dwih = _pad_gate_cols(dwih, h, hp)
    dwhh = _pad_gate_cols(_pad_axis(params["dec_whh"], 0, hp), h, hp)
    dec_w = jnp.concatenate([dwih, dwhh], axis=0).astype(bf16)

    return {
        "enc_emb": pad_emb(params["enc_emb"]),
        "dec_emb": pad_emb(params["dec_emb"]),
        "enc_wih": ewih,
        "enc_whh": ewhh,
        "dec_w": dec_w,
        "dec_fc_w": _pad_axis(_pad_axis(params["dec_fc_w"], 0, hp), 1, vp).astype(bf16),
        "dec_fc_b": _pad_axis(params["dec_fc_b"], 1, vp).astype(jnp.float32),
    }


def _seq2seq_fused_call(src_emb, x0_emb, pp, seq_len, tc, bc):
    sp, bp, ep1 = src_emb.shape
    hp = pp["enc_whh"].shape[0]
    vp = pp["dec_fc_w"].shape[1]
    n_t = sp // tc
    n_b = bp // bc

    def nbytes(shape, dt):
        return math.prod(shape) * jnp.dtype(dt).itemsize

    # VMEM budget sized from actual block footprints (x2 for double buffering)
    # plus the per-chunk gate-projection value and headroom.
    footprint = (2 * nbytes((tc, bc, ep1), jnp.bfloat16)
                 + 2 * nbytes((bc, ep1), jnp.bfloat16)
                 + 2 * nbytes((ep1, 4 * hp), jnp.bfloat16)
                 + 2 * nbytes((hp, 4 * hp), jnp.bfloat16)
                 + 2 * nbytes((ep1 + hp, 4 * hp), jnp.bfloat16)
                 + 2 * nbytes((hp, vp), jnp.bfloat16)
                 + 2 * nbytes((1, vp), jnp.float32)
                 + 2 * nbytes((bc, vp), jnp.float32)
                 + 2 * nbytes((bc, hp), jnp.float32)
                 + nbytes((tc * bc, 4 * hp), jnp.float32))
    vmem_limit = int(min(64 * 1024 * 1024,
                         max(2 * footprint + (2 << 20), 16 << 20)))

    flops = 2 * (sp * bp * ep1 * 4 * hp        # hoisted input projection
                 + sp * bp * hp * 4 * hp       # recurrence
                 + bp * (ep1 + hp) * 4 * hp    # decoder step
                 + bp * hp * vp)               # FC
    transcendentals = 5 * (sp + 1) * bp * hp
    weight_keys = ("enc_wih", "enc_whh", "dec_w", "dec_fc_w", "dec_fc_b")
    bytes_accessed = int(
        src_emb.size * src_emb.dtype.itemsize
        + x0_emb.size * x0_emb.dtype.itemsize
        + sum(int(pp[k].size) * pp[k].dtype.itemsize for k in weight_keys)
        + bp * vp * 4)

    # TODO(synk): grid-invariant weight specs could use pipeline_mode=
    #   pl.Buffered(1) to drop their second VMEM buffer.
    out = pl.pallas_call(
        _make_seq2seq_kernel(seq_len),
        out_shape=jax.ShapeDtypeStruct((bp, vp), jnp.float32),
        grid_spec=pltpu.PrefetchScalarGridSpec(
            num_scalar_prefetch=0,
            grid=(n_b, n_t),
            in_specs=[
                pl.BlockSpec((tc, bc, ep1), lambda bi, ti: (ti, bi, 0)),     # src chunk
                pl.BlockSpec((bc, ep1), lambda bi, ti: (bi, 0)),             # x0_emb
                pl.BlockSpec((ep1, 4 * hp), lambda bi, ti: (0, 0)),          # enc_wih(+b)
                pl.BlockSpec((hp, 4 * hp), lambda bi, ti: (0, 0)),           # enc_whh
                pl.BlockSpec((ep1 + hp, 4 * hp), lambda bi, ti: (0, 0)),     # dec_w(+b)
                pl.BlockSpec((hp, vp), lambda bi, ti: (0, 0)),               # fc_w
                pl.BlockSpec((1, vp), lambda bi, ti: (0, 0)),                # fc_b
            ],
            out_specs=pl.BlockSpec((bc, vp), lambda bi, ti: (bi, 0)),
            scratch_shapes=[pltpu.VMEM((bc, hp), jnp.float32),   # h carry
                            pltpu.VMEM((bc, hp), jnp.float32)],  # c carry
        ),
        compiler_params=pltpu.CompilerParams(
            dimension_semantics=("parallel", "arbitrary"),
            vmem_limit_bytes=vmem_limit),
        cost_estimate=pl.CostEstimate(flops=flops,
                                      transcendentals=transcendentals,
                                      bytes_accessed=bytes_accessed),
    )(src_emb, x0_emb,
      pp["enc_wih"], pp["enc_whh"], pp["dec_w"],
      pp["dec_fc_w"], pp["dec_fc_b"])
    return out


def seq2seq_forward(source, target, params, teacher_force_ratio=0.5,
                    tf_key=None):
    """Mirrors Seq2Seq.forward: encoder over source, ONE decoder step (the
    reference `return`s inside the loop at t=1); rest of `outputs` stays 0."""
    if tf_key is None:
        tf_key = jax.random.PRNGKey(42)

    s, b = source.shape
    t_len = target.shape[0]
    e = params["enc_wih"].shape[0]
    h_dim = params["enc_whh"].shape[0]
    v = params["dec_fc_w"].shape[1]

    # Padded TPU-friendly sizes: feature dims -> 128 lanes (emb gets +1 for the
    # ones/bias column), batch -> 16 rows (bf16 sublane packing).
    ep1 = _round_up(e + 1, 128)
    hp = _round_up(h_dim, 128)
    vp = _round_up(v, 128)
    bp = _round_up(b, 16)
    bc = min(bp, 128)                 # batch chunk ("parallel" grid axis)
    bp = _round_up(bp, bc)
    tc = min(s, 8)                    # time-chunk size (bounded in-kernel unroll)
    n_t = -(-s // tc)
    sp = n_t * tc

    pp = _prepare_padded_params(params, e, h_dim, ep1, hp, vp)

    outputs = jnp.zeros((t_len, b, v), jnp.float32)

    # Embedding lookups (plain-JAX glue) + zero padding of batch / time.
    # TODO(synk): the gather could be moved in-kernel via scalar-prefetched ids
    #   to avoid the (S, Bp, Ep) HBM round trip of the gathered activations.
    src_emb = jnp.take(pp["enc_emb"], source, axis=0)        # (S, B, Ep1) bf16
    src_emb = _pad_axis(_pad_axis(src_emb, 1, bp), 0, sp)    # (Sp, Bp, Ep1)
    x0_emb = _pad_axis(jnp.take(pp["dec_emb"], target[0], axis=0), 0, bp)

    out_p = _seq2seq_fused_call(src_emb, x0_emb, pp, s, tc, bc)
    output = out_p[:b, :v]

    t = 1
    outputs = outputs.at[t].set(output)

    best_guess = jnp.argmax(output, axis=1)
    coin = jax.random.uniform(tf_key)
    x = jnp.where(coin < teacher_force_ratio, target[t], best_guess)  # dead, as in ref
    del x
    return outputs


# --------------------------------- main --------------------------------------


if __name__ == "__main__":
    key = jax.random.PRNGKey(0)
    S, T, B = 8, 6, 4          # source len, target len, batch
    SRC_V, TGT_V = 24, 32      # vocab sizes
    E, H = 16, 32              # embedding dim, hidden dim

    ks = jax.random.split(key, 12)
    f32 = jnp.float32
    params = {
        "enc_emb":  (jax.random.normal(ks[0], (SRC_V, E)) * 0.1).astype(f32),
        "enc_wih":  (jax.random.normal(ks[1], (E, 4 * H)) * 0.1).astype(f32),
        "enc_whh":  (jax.random.normal(ks[2], (H, 4 * H)) * 0.1).astype(f32),
        "enc_b":    (jax.random.normal(ks[3], (1, 4 * H)) * 0.1).astype(f32),
        "dec_emb":  (jax.random.normal(ks[4], (TGT_V, E)) * 0.1).astype(f32),
        "dec_wih":  (jax.random.normal(ks[5], (E, 4 * H)) * 0.1).astype(f32),
        "dec_whh":  (jax.random.normal(ks[6], (H, 4 * H)) * 0.1).astype(f32),
        "dec_b":    (jax.random.normal(ks[7], (1, 4 * H)) * 0.1).astype(f32),
        "dec_fc_w": (jax.random.normal(ks[8], (H, TGT_V)) * 0.1).astype(f32),
        "dec_fc_b": (jax.random.normal(ks[9], (1, TGT_V)) * 0.1).astype(f32),
    }

    source = jax.random.randint(ks[10], (S, B), 0, SRC_V, dtype=jnp.int32)
    target = jax.random.randint(ks[11], (T, B), 0, TGT_V, dtype=jnp.int32)

    outputs = seq2seq_forward(source, target, params)
    jax.block_until_ready(outputs)
    assert outputs.shape == (T, B, TGT_V)
    print("KERNEL_OK")
</pallas_src>

<mosaic_0001>
module attributes {stable_mosaic.version = 11 : i64} {
  func.func @kernel(%arg0: i32, %arg1: i32, %arg2: memref<8x16x128xbf16, #tpu.memory_space<vmem>>, %arg3: memref<16x128xbf16, #tpu.memory_space<vmem>>, %arg4: memref<128x512xbf16, #tpu.memory_space<vmem>>, %arg5: memref<128x512xbf16, #tpu.memory_space<vmem>>, %arg6: memref<256x512xbf16, #tpu.memory_space<vmem>>, %arg7: memref<128x128xbf16, #tpu.memory_space<vmem>>, %arg8: memref<1x128xf32, #tpu.memory_space<vmem>>, %arg9: memref<16x128xf32, #tpu.memory_space<vmem>>, %arg10: memref<16x128xf32, #tpu.memory_space<vmem>>, %arg11: memref<16x128xf32, #tpu.memory_space<vmem>>) attributes {dimension_semantics = [#tpu.dimension_semantics<parallel>, #tpu.dimension_semantics<arbitrary>], iteration_bounds = array<i64: 1, 1>, scalar_prefetch = 0 : i64, scratch_operands = 2 : i64, tpu.core_type = #tpu.core_type<tc>, window_params = [{transform_indices = @transform_0, window_bounds = array<i64: 8, 16, 128>}, {transform_indices = @transform_1, window_bounds = array<i64: 16, 128>}, {pipeline_mode = #tpu.pipeline_mode<synchronous>, transform_indices = @transform_2, window_bounds = array<i64: 128, 512>}, {pipeline_mode = #tpu.pipeline_mode<synchronous>, transform_indices = @transform_3, window_bounds = array<i64: 128, 512>}, {pipeline_mode = #tpu.pipeline_mode<synchronous>, transform_indices = @transform_4, window_bounds = array<i64: 256, 512>}, {pipeline_mode = #tpu.pipeline_mode<synchronous>, transform_indices = @transform_5, window_bounds = array<i64: 128, 128>}, {pipeline_mode = #tpu.pipeline_mode<synchronous>, transform_indices = @transform_6, window_bounds = array<i64: 1, 128>}, {transform_indices = @transform_7, window_bounds = array<i64: 16, 128>}]} {
    %c0_i32 = arith.constant 0 : i32
    %0 = arith.cmpi eq, %arg1, %c0_i32 : i32
    %1 = arith.extui %0 : i1 to i32
    %c0_i32_0 = arith.constant 0 : i32
    %2 = arith.cmpi ne, %1, %c0_i32_0 : i32
    scf.if %2 {
      %cst_63 = arith.constant 0.000000e+00 : f32
      %254 = vector.broadcast %cst_63 : f32 to vector<16x128xf32>
      %c0_64 = arith.constant 0 : index
      %c0_65 = arith.constant 0 : index
      %255 = vector.load %arg10[%c0_64, %c0_65] : memref<16x128xf32, #tpu.memory_space<vmem>>, vector<16x128xf32>
      tpu.vector_store %arg10[%c0_64, %c0_65], %254 {strides = array<i32>} : memref<16x128xf32, #tpu.memory_space<vmem>>, vector<16x128xf32>,
      %cst_66 = arith.constant 0.000000e+00 : f32
      %256 = vector.broadcast %cst_66 : f32 to vector<16x128xf32>
      %c0_67 = arith.constant 0 : index
      %c0_68 = arith.constant 0 : index
      %257 = vector.load %arg11[%c0_67, %c0_68] : memref<16x128xf32, #tpu.memory_space<vmem>>, vector<16x128xf32>
      tpu.vector_store %arg11[%c0_67, %c0_68], %256 {strides = array<i32>} : memref<16x128xf32, #tpu.memory_space<vmem>>, vector<16x128xf32>,
    } else {
    }
    %c0 = arith.constant 0 : index
    %c0_1 = arith.constant 0 : index
    %c0_2 = arith.constant 0 : index
    %3 = vector.load %arg2[%c0, %c0_1, %c0_2] : memref<8x16x128xbf16, #tpu.memory_space<vmem>>, vector<8x16x128xbf16>
    %4 = vector.shape_cast %3 : vector<8x16x128xbf16> to vector<128x128xbf16>
    %c0_3 = arith.constant 0 : index
    %c0_4 = arith.constant 0 : index
    %5 = vector.load %arg4[%c0_3, %c0_4] : memref<128x512xbf16, #tpu.memory_space<vmem>>, vector<128x512xbf16>
    %cst = arith.constant dense<0.000000e+00> : vector<128x512xf32>
    %6 = tpu.matmul %4, %5, %cst {dimension_numbers = #tpu.dot_dimension_numbers<[1], [0], [0], [1], [0, 0, 1, 1], [], []>} : vector<128x128xbf16>, vector<128x512xbf16>, vector<128x512xf32> -> vector<128x512xf32>
    %c0_5 = arith.constant 0 : index
    %c0_6 = arith.constant 0 : index
    %7 = vector.load %arg10[%c0_5, %c0_6] : memref<16x128xf32, #tpu.memory_space<vmem>>, vector<16x128xf32>
    %c0_7 = arith.constant 0 : index
    %c0_8 = arith.constant 0 : index
    %8 = vector.load %arg11[%c0_7, %c0_8] : memref<16x128xf32, #tpu.memory_space<vmem>>, vector<16x128xf32>
    %9 = vector.extract_strided_slice %6 {offsets = [0, 0], sizes = [16, 512], strides = [1, 1]} : vector<128x512xf32> to vector<16x512xf32>
    %10 = arith.truncf %7 : vector<16x128xf32> to vector<16x128xbf16>
    %c0_9 = arith.constant 0 : index
    %c0_10 = arith.constant 0 : index
    %11 = vector.load %arg5[%c0_9, %c0_10] : memref<128x512xbf16, #tpu.memory_space<vmem>>, vector<128x512xbf16>
    %cst_11 = arith.constant dense<0.000000e+00> : vector<16x512xf32>
    %12 = tpu.matmul %10, %11, %cst_11 {dimension_numbers = #tpu.dot_dimension_numbers<[1], [0], [0], [1], [0, 0, 1, 1], [], []>} : vector<16x128xbf16>, vector<128x512xbf16>, vector<16x512xf32> -> vector<16x512xf32>
    %13 = arith.addf %9, %12 : vector<16x512xf32>
    %14 = vector.extract_strided_slice %13 {offsets = [0, 0], sizes = [16, 128], strides = [1, 1]} : vector<16x512xf32> to vector<16x128xf32>
    %15 = arith.negf %14 : vector<16x128xf32>
    %16 = math.exp %15 : vector<16x128xf32>
    %cst_12 = arith.constant 1.000000e+00 : f32
    %17 = vector.broadcast %cst_12 : f32 to vector<16x128xf32>
    %18 = arith.addf %17, %16 : vector<16x128xf32>
    %19 = arith.divf %17, %18 : vector<16x128xf32>
    %20 = vector.extract_strided_slice %13 {offsets = [0, 128], sizes = [16, 128], strides = [1, 1]} : vector<16x512xf32> to vector<16x128xf32>
    %21 = arith.negf %20 : vector<16x128xf32>
    %22 = math.exp %21 : vector<16x128xf32>
    %cst_13 = arith.constant 1.000000e+00 : f32
    %23 = vector.broadcast %cst_13 : f32 to vector<16x128xf32>
    %24 = arith.addf %23, %22 : vector<16x128xf32>
    %25 = arith.divf %23, %24 : vector<16x128xf32>
    %26 = vector.extract_strided_slice %13 {offsets = [0, 256], sizes = [16, 128], strides = [1, 1]} : vector<16x512xf32> to vector<16x128xf32>
    %27 = math.tanh %26 : vector<16x128xf32>
    %28 = vector.extract_strided_slice %13 {offsets = [0, 384], sizes = [16, 128], strides = [1, 1]} : vector<16x512xf32> to vector<16x128xf32>
    %29 = arith.negf %28 : vector<16x128xf32>
    %30 = math.exp %29 : vector<16x128xf32>
    %cst_14 = arith.constant 1.000000e+00 : f32
    %31 = vector.broadcast %cst_14 : f32 to vector<16x128xf32>
    %32 = arith.addf %31, %30 : vector<16x128xf32>
    %33 = arith.divf %31, %32 : vector<16x128xf32>
    %34 = arith.mulf %25, %8 : vector<16x128xf32>
    %35 = arith.mulf %19, %27 : vector<16x128xf32>
    %36 = arith.addf %34, %35 : vector<16x128xf32>
    %37 = math.tanh %36 : vector<16x128xf32>
    %38 = arith.mulf %33, %37 : vector<16x128xf32>
    %39 = vector.extract_strided_slice %6 {offsets = [16, 0], sizes = [16, 512], strides = [1, 1]} : vector<128x512xf32> to vector<16x512xf32>
    %40 = arith.truncf %38 : vector<16x128xf32> to vector<16x128xbf16>
    %c0_15 = arith.constant 0 : index
    %c0_16 = arith.constant 0 : index
    %41 = vector.load %arg5[%c0_15, %c0_16] : memref<128x512xbf16, #tpu.memory_space<vmem>>, vector<128x512xbf16>
    %cst_17 = arith.constant dense<0.000000e+00> : vector<16x512xf32>
    %42 = tpu.matmul %40, %41, %cst_17 {dimension_numbers = #tpu.dot_dimension_numbers<[1], [0], [0], [1], [0, 0, 1, 1], [], []>} : vector<16x128xbf16>, vector<128x512xbf16>, vector<16x512xf32> -> vector<16x512xf32>
    %43 = arith.addf %39, %42 : vector<16x512xf32>
    %44 = vector.extract_strided_slice %43 {offsets = [0, 0], sizes = [16, 128], strides = [1, 1]} : vector<16x512xf32> to vector<16x128xf32>
    %45 = arith.negf %44 : vector<16x128xf32>
    %46 = math.exp %45 : vector<16x128xf32>
    %cst_18 = arith.constant 1.000000e+00 : f32
    %47 = vector.broadcast %cst_18 : f32 to vector<16x128xf32>
    %48 = arith.addf %47, %46 : vector<16x128xf32>
    %49 = arith.divf %47, %48 : vector<16x128xf32>
    %50 = vector.extract_strided_slice %43 {offsets = [0, 128], sizes = [16, 128], strides = [1, 1]} : vector<16x512xf32> to vector<16x128xf32>
    %51 = arith.negf %50 : vector<16x128xf32>
    %52 = math.exp %51 : vector<16x128xf32>
    %cst_19 = arith.constant 1.000000e+00 : f32
    %53 = vector.broadcast %cst_19 : f32 to vector<16x128xf32>
    %54 = arith.addf %53, %52 : vector<16x128xf32>
    %55 = arith.divf %53, %54 : vector<16x128xf32>
    %56 = vector.extract_strided_slice %43 {offsets = [0, 256], sizes = [16, 128], strides = [1, 1]} : vector<16x512xf32> to vector<16x128xf32>
    %57 = math.tanh %56 : vector<16x128xf32>
    %58 = vector.extract_strided_slice %43 {offsets = [0, 384], sizes = [16, 128], strides = [1, 1]} : vector<16x512xf32> to vector<16x128xf32>
    %59 = arith.negf %58 : vector<16x128xf32>
    %60 = math.exp %59 : vector<16x128xf32>
    %cst_20 = arith.constant 1.000000e+00 : f32
    %61 = vector.broadcast %cst_20 : f32 to vector<16x128xf32>
    %62 = arith.addf %61, %60 : vector<16x128xf32>
    %63 = arith.divf %61, %62 : vector<16x128xf32>
    %64 = arith.mulf %55, %36 : vector<16x128xf32>
    %65 = arith.mulf %49, %57 : vector<16x128xf32>
    %66 = arith.addf %64, %65 : vector<16x128xf32>
    %67 = math.tanh %66 : vector<16x128xf32>
    %68 = arith.mulf %63, %67 : vector<16x128xf32>
    %69 = vector.extract_strided_slice %6 {offsets = [32, 0], sizes = [16, 512], strides = [1, 1]} : vector<128x512xf32> to vector<16x512xf32>
    %70 = arith.truncf %68 : vector<16x128xf32> to vector<16x128xbf16>
    %c0_21 = arith.constant 0 : index
    %c0_22 = arith.constant 0 : index
    %71 = vector.load %arg5[%c0_21, %c0_22] : memref<128x512xbf16, #tpu.memory_space<vmem>>, vector<128x512xbf16>
    %cst_23 = arith.constant dense<0.000000e+00> : vector<16x512xf32>
    %72 = tpu.matmul %70, %71, %cst_23 {dimension_numbers = #tpu.dot_dimension_numbers<[1], [0], [0], [1], [0, 0, 1, 1], [], []>} : vector<16x128xbf16>, vector<128x512xbf16>, vector<16x512xf32> -> vector<16x512xf32>
    %73 = arith.addf %69, %72 : vector<16x512xf32>
    %74 = vector.extract_strided_slice %73 {offsets = [0, 0], sizes = [16, 128], strides = [1, 1]} : vector<16x512xf32> to vector<16x128xf32>
    %75 = arith.negf %74 : vector<16x128xf32>
    %76 = math.exp %75 : vector<16x128xf32>
    %cst_24 = arith.constant 1.000000e+00 : f32
    %77 = vector.broadcast %cst_24 : f32 to vector<16x128xf32>
    %78 = arith.addf %77, %76 : vector<16x128xf32>
    %79 = arith.divf %77, %78 : vector<16x128xf32>
    %80 = vector.extract_strided_slice %73 {offsets = [0, 128], sizes = [16, 128], strides = [1, 1]} : vector<16x512xf32> to vector<16x128xf32>
    %81 = arith.negf %80 : vector<16x128xf32>
    %82 = math.exp %81 : vector<16x128xf32>
    %cst_25 = arith.constant 1.000000e+00 : f32
    %83 = vector.broadcast %cst_25 : f32 to vector<16x128xf32>
    %84 = arith.addf %83, %82 : vector<16x128xf32>
    %85 = arith.divf %83, %84 : vector<16x128xf32>
    %86 = vector.extract_strided_slice %73 {offsets = [0, 256], sizes = [16, 128], strides = [1, 1]} : vector<16x512xf32> to vector<16x128xf32>
    %87 = math.tanh %86 : vector<16x128xf32>
    %88 = vector.extract_strided_slice %73 {offsets = [0, 384], sizes = [16, 128], strides = [1, 1]} : vector<16x512xf32> to vector<16x128xf32>
    %89 = arith.negf %88 : vector<16x128xf32>
    %90 = math.exp %89 : vector<16x128xf32>
    %cst_26 = arith.constant 1.000000e+00 : f32
    %91 = vector.broadcast %cst_26 : f32 to vector<16x128xf32>
    %92 = arith.addf %91, %90 : vector<16x128xf32>
    %93 = arith.divf %91, %92 : vector<16x128xf32>
    %94 = arith.mulf %85, %66 : vector<16x128xf32>
    %95 = arith.mulf %79, %87 : vector<16x128xf32>
    %96 = arith.addf %94, %95 : vector<16x128xf32>
    %97 = math.tanh %96 : vector<16x128xf32>
    %98 = arith.mulf %93, %97 : vector<16x128xf32>
    %99 = vector.extract_strided_slice %6 {offsets = [48, 0], sizes = [16, 512], strides = [1, 1]} : vector<128x512xf32> to vector<16x512xf32>
    %100 = arith.truncf %98 : vector<16x128xf32> to vector<16x128xbf16>
    %c0_27 = arith.constant 0 : index
    %c0_28 = arith.constant 0 : index
    %101 = vector.load %arg5[%c0_27, %c0_28] : memref<128x512xbf16, #tpu.memory_space<vmem>>, vector<128x512xbf16>
    %cst_29 = arith.constant dense<0.000000e+00> : vector<16x512xf32>
    %102 = tpu.matmul %100, %101, %cst_29 {dimension_numbers = #tpu.dot_dimension_numbers<[1], [0], [0], [1], [0, 0, 1, 1], [], []>} : vector<16x128xbf16>, vector<128x512xbf16>, vector<16x512xf32> -> vector<16x512xf32>
    %103 = arith.addf %99, %102 : vector<16x512xf32>
    %104 = vector.extract_strided_slice %103 {offsets = [0, 0], sizes = [16, 128], strides = [1, 1]} : vector<16x512xf32> to vector<16x128xf32>
    %105 = arith.negf %104 : vector<16x128xf32>
    %106 = math.exp %105 : vector<16x128xf32>
    %cst_30 = arith.constant 1.000000e+00 : f32
    %107 = vector.broadcast %cst_30 : f32 to vector<16x128xf32>
    %108 = arith.addf %107, %106 : vector<16x128xf32>
    %109 = arith.divf %107, %108 : vector<16x128xf32>
    %110 = vector.extract_strided_slice %103 {offsets = [0, 128], sizes = [16, 128], strides = [1, 1]} : vector<16x512xf32> to vector<16x128xf32>
    %111 = arith.negf %110 : vector<16x128xf32>
    %112 = math.exp %111 : vector<16x128xf32>
    %cst_31 = arith.constant 1.000000e+00 : f32
    %113 = vector.broadcast %cst_31 : f32 to vector<16x128xf32>
    %114 = arith.addf %113, %112 : vector<16x128xf32>
    %115 = arith.divf %113, %114 : vector<16x128xf32>
    %116 = vector.extract_strided_slice %103 {offsets = [0, 256], sizes = [16, 128], strides = [1, 1]} : vector<16x512xf32> to vector<16x128xf32>
    %117 = math.tanh %116 : vector<16x128xf32>
    %118 = vector.extract_strided_slice %103 {offsets = [0, 384], sizes = [16, 128], strides = [1, 1]} : vector<16x512xf32> to vector<16x128xf32>
    %119 = arith.negf %118 : vector<16x128xf32>
    %120 = math.exp %119 : vector<16x128xf32>
    %cst_32 = arith.constant 1.000000e+00 : f32
    %121 = vector.broadcast %cst_32 : f32 to vector<16x128xf32>
    %122 = arith.addf %121, %120 : vector<16x128xf32>
    %123 = arith.divf %121, %122 : vector<16x128xf32>
    %124 = arith.mulf %115, %96 : vector<16x128xf32>
    %125 = arith.mulf %109, %117 : vector<16x128xf32>
    %126 = arith.addf %124, %125 : vector<16x128xf32>
    %127 = math.tanh %126 : vector<16x128xf32>
    %128 = arith.mulf %123, %127 : vector<16x128xf32>
    %129 = vector.extract_strided_slice %6 {offsets = [64, 0], sizes = [16, 512], strides = [1, 1]} : vector<128x512xf32> to vector<16x512xf32>
    %130 = arith.truncf %128 : vector<16x128xf32> to vector<16x128xbf16>
    %c0_33 = arith.constant 0 : index
    %c0_34 = arith.constant 0 : index
    %131 = vector.load %arg5[%c0_33, %c0_34] : memref<128x512xbf16, #tpu.memory_space<vmem>>, vector<128x512xbf16>
    %cst_35 = arith.constant dense<0.000000e+00> : vector<16x512xf32>
    %132 = tpu.matmul %130, %131, %cst_35 {dimension_numbers = #tpu.dot_dimension_numbers<[1], [0], [0], [1], [0, 0, 1, 1], [], []>} : vector<16x128xbf16>, vector<128x512xbf16>, vector<16x512xf32> -> vector<16x512xf32>
    %133 = arith.addf %129, %132 : vector<16x512xf32>
    %134 = vector.extract_strided_slice %133 {offsets = [0, 0], sizes = [16, 128], strides = [1, 1]} : vector<16x512xf32> to vector<16x128xf32>
    %135 = arith.negf %134 : vector<16x128xf32>
    %136 = math.exp %135 : vector<16x128xf32>
    %cst_36 = arith.constant 1.000000e+00 : f32
    %137 = vector.broadcast %cst_36 : f32 to vector<16x128xf32>
    %138 = arith.addf %137, %136 : vector<16x128xf32>
    %139 = arith.divf %137, %138 : vector<16x128xf32>
    %140 = vector.extract_strided_slice %133 {offsets = [0, 128], sizes = [16, 128], strides = [1, 1]} : vector<16x512xf32> to vector<16x128xf32>
    %141 = arith.negf %140 : vector<16x128xf32>
    %142 = math.exp %141 : vector<16x128xf32>
    %cst_37 = arith.constant 1.000000e+00 : f32
    %143 = vector.broadcast %cst_37 : f32 to vector<16x128xf32>
    %144 = arith.addf %143, %142 : vector<16x128xf32>
    %145 = arith.divf %143, %144 : vector<16x128xf32>
    %146 = vector.extract_strided_slice %133 {offsets = [0, 256], sizes = [16, 128], strides = [1, 1]} : vector<16x512xf32> to vector<16x128xf32>
    %147 = math.tanh %146 : vector<16x128xf32>
    %148 = vector.extract_strided_slice %133 {offsets = [0, 384], sizes = [16, 128], strides = [1, 1]} : vector<16x512xf32> to vector<16x128xf32>
    %149 = arith.negf %148 : vector<16x128xf32>
    %150 = math.exp %149 : vector<16x128xf32>
    %cst_38 = arith.constant 1.000000e+00 : f32
    %151 = vector.broadcast %cst_38 : f32 to vector<16x128xf32>
    %152 = arith.addf %151, %150 : vector<16x128xf32>
    %153 = arith.divf %151, %152 : vector<16x128xf32>
    %154 = arith.mulf %145, %126 : vector<16x128xf32>
    %155 = arith.mulf %139, %147 : vector<16x128xf32>
    %156 = arith.addf %154, %155 : vector<16x128xf32>
    %157 = math.tanh %156 : vector<16x128xf32>
    %158 = arith.mulf %153, %157 : vector<16x128xf32>
    %159 = vector.extract_strided_slice %6 {offsets = [80, 0], sizes = [16, 512], strides = [1, 1]} : vector<128x512xf32> to vector<16x512xf32>
    %160 = arith.truncf %158 : vector<16x128xf32> to vector<16x128xbf16>
    %c0_39 = arith.constant 0 : index
    %c0_40 = arith.constant 0 : index
    %161 = vector.load %arg5[%c0_39, %c0_40] : memref<128x512xbf16, #tpu.memory_space<vmem>>, vector<128x512xbf16>
    %cst_41 = arith.constant dense<0.000000e+00> : vector<16x512xf32>
    %162 = tpu.matmul %160, %161, %cst_41 {dimension_numbers = #tpu.dot_dimension_numbers<[1], [0], [0], [1], [0, 0, 1, 1], [], []>} : vector<16x128xbf16>, vector<128x512xbf16>, vector<16x512xf32> -> vector<16x512xf32>
    %163 = arith.addf %159, %162 : vector<16x512xf32>
    %164 = vector.extract_strided_slice %163 {offsets = [0, 0], sizes = [16, 128], strides = [1, 1]} : vector<16x512xf32> to vector<16x128xf32>
    %165 = arith.negf %164 : vector<16x128xf32>
    %166 = math.exp %165 : vector<16x128xf32>
    %cst_42 = arith.constant 1.000000e+00 : f32
    %167 = vector.broadcast %cst_42 : f32 to vector<16x128xf32>
    %168 = arith.addf %167, %166 : vector<16x128xf32>
    %169 = arith.divf %167, %168 : vector<16x128xf32>
    %170 = vector.extract_strided_slice %163 {offsets = [0, 128], sizes = [16, 128], strides = [1, 1]} : vector<16x512xf32> to vector<16x128xf32>
    %171 = arith.negf %170 : vector<16x128xf32>
    %172 = math.exp %171 : vector<16x128xf32>
    %cst_43 = arith.constant 1.000000e+00 : f32
    %173 = vector.broadcast %cst_43 : f32 to vector<16x128xf32>
    %174 = arith.addf %173, %172 : vector<16x128xf32>
    %175 = arith.divf %173, %174 : vector<16x128xf32>
    %176 = vector.extract_strided_slice %163 {offsets = [0, 256], sizes = [16, 128], strides = [1, 1]} : vector<16x512xf32> to vector<16x128xf32>
    %177 = math.tanh %176 : vector<16x128xf32>
    %178 = vector.extract_strided_slice %163 {offsets = [0, 384], sizes = [16, 128], strides = [1, 1]} : vector<16x512xf32> to vector<16x128xf32>
    %179 = arith.negf %178 : vector<16x128xf32>
    %180 = math.exp %179 : vector<16x128xf32>
    %cst_44 = arith.constant 1.000000e+00 : f32
    %181 = vector.broadcast %cst_44 : f32 to vector<16x128xf32>
    %182 = arith.addf %181, %180 : vector<16x128xf32>
    %183 = arith.divf %181, %182 : vector<16x128xf32>
    %184 = arith.mulf %175, %156 : vector<16x128xf32>
    %185 = arith.mulf %169, %177 : vector<16x128xf32>
    %186 = arith.addf %184, %185 : vector<16x128xf32>
    %187 = math.tanh %186 : vector<16x128xf32>
    %188 = arith.mulf %183, %187 : vector<16x128xf32>
    %189 = vector.extract_strided_slice %6 {offsets = [96, 0], sizes = [16, 512], strides = [1, 1]} : vector<128x512xf32> to vector<16x512xf32>
    %190 = arith.truncf %188 : vector<16x128xf32> to vector<16x128xbf16>
    %c0_45 = arith.constant 0 : index
    %c0_46 = arith.constant 0 : index
    %191 = vector.load %arg5[%c0_45, %c0_46] : memref<128x512xbf16, #tpu.memory_space<vmem>>, vector<128x512xbf16>
    %cst_47 = arith.constant dense<0.000000e+00> : vector<16x512xf32>
    %192 = tpu.matmul %190, %191, %cst_47 {dimension_numbers = #tpu.dot_dimension_numbers<[1], [0], [0], [1], [0, 0, 1, 1], [], []>} : vector<16x128xbf16>, vector<128x512xbf16>, vector<16x512xf32> -> vector<16x512xf32>
    %193 = arith.addf %189, %192 : vector<16x512xf32>
    %194 = vector.extract_strided_slice %193 {offsets = [0, 0], sizes = [16, 128], strides = [1, 1]} : vector<16x512xf32> to vector<16x128xf32>
    %195 = arith.negf %194 : vector<16x128xf32>
    %196 = math.exp %195 : vector<16x128xf32>
    %cst_48 = arith.constant 1.000000e+00 : f32
    %197 = vector.broadcast %cst_48 : f32 to vector<16x128xf32>
    %198 = arith.addf %197, %196 : vector<16x128xf32>
    %199 = arith.divf %197, %198 : vector<16x128xf32>
    %200 = vector.extract_strided_slice %193 {offsets = [0, 128], sizes = [16, 128], strides = [1, 1]} : vector<16x512xf32> to vector<16x128xf32>
    %201 = arith.negf %200 : vector<16x128xf32>
    %202 = math.exp %201 : vector<16x128xf32>
    %cst_49 = arith.constant 1.000000e+00 : f32
    %203 = vector.broadcast %cst_49 : f32 to vector<16x128xf32>
    %204 = arith.addf %203, %202 : vector<16x128xf32>
    %205 = arith.divf %203, %204 : vector<16x128xf32>
    %206 = vector.extract_strided_slice %193 {offsets = [0, 256], sizes = [16, 128], strides = [1, 1]} : vector<16x512xf32> to vector<16x128xf32>
    %207 = math.tanh %206 : vector<16x128xf32>
    %208 = vector.extract_strided_slice %193 {offsets = [0, 384], sizes = [16, 128], strides = [1, 1]} : vector<16x512xf32> to vector<16x128xf32>
    %209 = arith.negf %208 : vector<16x128xf32>
    %210 = math.exp %209 : vector<16x128xf32>
    %cst_50 = arith.constant 1.000000e+00 : f32
    %211 = vector.broadcast %cst_50 : f32 to vector<16x128xf32>
    %212 = arith.addf %211, %210 : vector<16x128xf32>
    %213 = arith.divf %211, %212 : vector<16x128xf32>
    %214 = arith.mulf %205, %186 : vector<16x128xf32>
    %215 = arith.mulf %199, %207 : vector<16x128xf32>
    %216 = arith.addf %214, %215 : vector<16x128xf32>
    %217 = math.tanh %216 : vector<16x128xf32>
    %218 = arith.mulf %213, %217 : vector<16x128xf32>
    %219 = vector.extract_strided_slice %6 {offsets = [112, 0], sizes = [16, 512], strides = [1, 1]} : vector<128x512xf32> to vector<16x512xf32>
    %220 = arith.truncf %218 : vector<16x128xf32> to vector<16x128xbf16>
    %c0_51 = arith.constant 0 : index
    %c0_52 = arith.constant 0 : index
    %221 = vector.load %arg5[%c0_51, %c0_52] : memref<128x512xbf16, #tpu.memory_space<vmem>>, vector<128x512xbf16>
    %cst_53 = arith.constant dense<0.000000e+00> : vector<16x512xf32>
    %222 = tpu.matmul %220, %221, %cst_53 {dimension_numbers = #tpu.dot_dimension_numbers<[1], [0], [0], [1], [0, 0, 1, 1], [], []>} : vector<16x128xbf16>, vector<128x512xbf16>, vector<16x512xf32> -> vector<16x512xf32>
    %223 = arith.addf %219, %222 : vector<16x512xf32>
    %224 = vector.extract_strided_slice %223 {offsets = [0, 0], sizes = [16, 128], strides = [1, 1]} : vector<16x512xf32> to vector<16x128xf32>
    %225 = arith.negf %224 : vector<16x128xf32>
    %226 = math.exp %225 : vector<16x128xf32>
    %cst_54 = arith.constant 1.000000e+00 : f32
    %227 = vector.broadcast %cst_54 : f32 to vector<16x128xf32>
    %228 = arith.addf %227, %226 : vector<16x128xf32>
    %229 = arith.divf %227, %228 : vector<16x128xf32>
    %230 = vector.extract_strided_slice %223 {offsets = [0, 128], sizes = [16, 128], strides = [1, 1]} : vector<16x512xf32> to vector<16x128xf32>
    %231 = arith.negf %230 : vector<16x128xf32>
    %232 = math.exp %231 : vector<16x128xf32>
    %cst_55 = arith.constant 1.000000e+00 : f32
    %233 = vector.broadcast %cst_55 : f32 to vector<16x128xf32>
    %234 = arith.addf %233, %232 : vector<16x128xf32>
    %235 = arith.divf %233, %234 : vector<16x128xf32>
    %236 = vector.extract_strided_slice %223 {offsets = [0, 256], sizes = [16, 128], strides = [1, 1]} : vector<16x512xf32> to vector<16x128xf32>
    %237 = math.tanh %236 : vector<16x128xf32>
    %238 = vector.extract_strided_slice %223 {offsets = [0, 384], sizes = [16, 128], strides = [1, 1]} : vector<16x512xf32> to vector<16x128xf32>
    %239 = arith.negf %238 : vector<16x128xf32>
    %240 = math.exp %239 : vector<16x128xf32>
    %cst_56 = arith.constant 1.000000e+00 : f32
    %241 = vector.broadcast %cst_56 : f32 to vector<16x128xf32>
    %242 = arith.addf %241, %240 : vector<16x128xf32>
    %243 = arith.divf %241, %242 : vector<16x128xf32>
    %244 = arith.mulf %235, %216 : vector<16x128xf32>
    %245 = arith.mulf %229, %237 : vector<16x128xf32>
    %246 = arith.addf %244, %245 : vector<16x128xf32>
    %247 = math.tanh %246 : vector<16x128xf32>
    %248 = arith.mulf %243, %247 : vector<16x128xf32>
    %c0_57 = arith.constant 0 : index
    %c0_58 = arith.constant 0 : index
    %249 = vector.load %arg10[%c0_57, %c0_58] : memref<16x128xf32, #tpu.memory_space<vmem>>, vector<16x128xf32>
    tpu.vector_store %arg10[%c0_57, %c0_58], %248 {strides = array<i32>} : memref<16x128xf32, #tpu.memory_space<vmem>>, vector<16x128xf32>,
    %c0_59 = arith.constant 0 : index
    %c0_60 = arith.constant 0 : index
    %250 = vector.load %arg11[%c0_59, %c0_60] : memref<16x128xf32, #tpu.memory_space<vmem>>, vector<16x128xf32>
    tpu.vector_store %arg11[%c0_59, %c0_60], %246 {strides = array<i32>} : memref<16x128xf32, #tpu.memory_space<vmem>>, vector<16x128xf32>,
    %c0_i32_61 = arith.constant 0 : i32
    %251 = arith.cmpi eq, %arg1, %c0_i32_61 : i32
    %252 = arith.extui %251 : i1 to i32
    %c0_i32_62 = arith.constant 0 : i32
    %253 = arith.cmpi ne, %252, %c0_i32_62 : i32
    scf.if %253 {
      %c0_63 = arith.constant 0 : index
      %c0_64 = arith.constant 0 : index
      %254 = vector.load %arg3[%c0_63, %c0_64] : memref<16x128xbf16, #tpu.memory_space<vmem>>, vector<16x128xbf16>
      %255 = arith.truncf %248 : vector<16x128xf32> to vector<16x128xbf16>
      %256 = tpu.concatenate %254, %255 in 1 : vector<16x128xbf16>, vector<16x128xbf16> -> vector<16x256xbf16>
      %c0_65 = arith.constant 0 : index
      %c0_66 = arith.constant 0 : index
      %257 = vector.load %arg6[%c0_65, %c0_66] : memref<256x512xbf16, #tpu.memory_space<vmem>>, vector<256x512xbf16>
      %cst_67 = arith.constant dense<0.000000e+00> : vector<16x512xf32>
      %258 = tpu.matmul %256, %257, %cst_67 {dimension_numbers = #tpu.dot_dimension_numbers<[1], [0], [0], [1], [0, 0, 1, 1], [], []>} : vector<16x256xbf16>, vector<256x512xbf16>, vector<16x512xf32> -> vector<16x512xf32>
      %259 = vector.extract_strided_slice %258 {offsets = [0, 0], sizes = [16, 128], strides = [1, 1]} : vector<16x512xf32> to vector<16x128xf32>
      %260 = arith.negf %259 : vector<16x128xf32>
      %261 = math.exp %260 : vector<16x128xf32>
      %cst_68 = arith.constant 1.000000e+00 : f32
      %262 = vector.broadcast %cst_68 : f32 to vector<16x128xf32>
      %263 = arith.addf %262, %261 : vector<16x128xf32>
      %264 = arith.divf %262, %263 : vector<16x128xf32>
      %265 = vector.extract_strided_slice %258 {offsets = [0, 128], sizes = [16, 128], strides = [1, 1]} : vector<16x512xf32> to vector<16x128xf32>
      %266 = arith.negf %265 : vector<16x128xf32>
      %267 = math.exp %266 : vector<16x128xf32>
      %cst_69 = arith.constant 1.000000e+00 : f32
      %268 = vector.broadcast %cst_69 : f32 to vector<16x128xf32>
      %269 = arith.addf %268, %267 : vector<16x128xf32>
      %270 = arith.divf %268, %269 : vector<16x128xf32>
      %271 = vector.extract_strided_slice %258 {offsets = [0, 256], sizes = [16, 128], strides = [1, 1]} : vector<16x512xf32> to vector<16x128xf32>
      %272 = math.tanh %271 : vector<16x128xf32>
      %273 = vector.extract_strided_slice %258 {offsets = [0, 384], sizes = [16, 128], strides = [1, 1]} : vector<16x512xf32> to vector<16x128xf32>
      %274 = arith.negf %273 : vector<16x128xf32>
      %275 = math.exp %274 : vector<16x128xf32>
      %cst_70 = arith.constant 1.000000e+00 : f32
      %276 = vector.broadcast %cst_70 : f32 to vector<16x128xf32>
      %277 = arith.addf %276, %275 : vector<16x128xf32>
      %278 = arith.divf %276, %277 : vector<16x128xf32>
      %279 = arith.mulf %270, %246 : vector<16x128xf32>
      %280 = arith.mulf %264, %272 : vector<16x128xf32>
      %281 = arith.addf %279, %280 : vector<16x128xf32>
      %282 = math.tanh %281 : vector<16x128xf32>
      %283 = arith.mulf %278, %282 : vector<16x128xf32>
      %284 = arith.truncf %283 : vector<16x128xf32> to vector<16x128xbf16>
      %c0_71 = arith.constant 0 : index
      %c0_72 = arith.constant 0 : index
      %285 = vector.load %arg7[%c0_71, %c0_72] : memref<128x128xbf16, #tpu.memory_space<vmem>>, vector<128x128xbf16>
      %cst_73 = arith.constant dense<0.000000e+00> : vector<16x128xf32>
      %286 = tpu.matmul %284, %285, %cst_73 {dimension_numbers = #tpu.dot_dimension_numbers<[1], [0], [0], [1], [0, 0, 1, 1], [], []>} : vector<16x128xbf16>, vector<128x128xbf16>, vector<16x128xf32> -> vector<16x128xf32>
      %c0_74 = arith.constant 0 : index
      %c0_75 = arith.constant 0 : index
      %287 = vector.load %arg8[%c0_74, %c0_75] : memref<1x128xf32, #tpu.memory_space<vmem>>, vector<1x128xf32>
      %288 = vector.broadcast %287 : vector<1x128xf32> to vector<16x128xf32>
      %289 = arith.addf %286, %288 : vector<16x128xf32>
      %c0_76 = arith.constant 0 : index
      %c0_77 = arith.constant 0 : index
      %290 = vector.load %arg9[%c0_76, %c0_77] : memref<16x128xf32, #tpu.memory_space<vmem>>, vector<16x128xf32>
      tpu.vector_store %arg9[%c0_76, %c0_77], %289 {strides = array<i32>} : memref<16x128xf32, #tpu.memory_space<vmem>>, vector<16x128xf32>,
    } else {
    }
    return
  }
  func.func @transform_0(%arg0: i32, %arg1: i32) -> (i32, i32, i32) {
    %c0_i32 = arith.constant 0 : i32
    %c0_i32_0 = arith.constant 0 : i32
    return %arg1, %arg0, %c0_i32 : i32, i32, i32
  }
  func.func @transform_1(%arg0: i32, %arg1: i32) -> (i32, i32) {
    %c0_i32 = arith.constant 0 : i32
    %c0_i32_0 = arith.constant 0 : i32
    return %arg0, %c0_i32 : i32, i32
  }
  func.func @transform_2(%arg0: i32, %arg1: i32) -> (i32, i32) {
    %c0_i32 = arith.constant 0 : i32
    %c0_i32_0 = arith.constant 0 : i32
    %c0_i32_1 = arith.constant 0 : i32
    return %c0_i32, %c0_i32_0 : i32, i32
  }
  func.func @transform_3(%arg0: i32, %arg1: i32) -> (i32, i32) {
    %c0_i32 = arith.constant 0 : i32
    %c0_i32_0 = arith.constant 0 : i32
    %c0_i32_1 = arith.constant 0 : i32
    return %c0_i32, %c0_i32_0 : i32, i32
  }
  func.func @transform_4(%arg0: i32, %arg1: i32) -> (i32, i32) {
    %c0_i32 = arith.constant 0 : i32
    %c0_i32_0 = arith.constant 0 : i32
    %c0_i32_1 = arith.constant 0 : i32
    return %c0_i32, %c0_i32_0 : i32, i32
  }
  func.func @transform_5(%arg0: i32, %arg1: i32) -> (i32, i32) {
    %c0_i32 = arith.constant 0 : i32
    %c0_i32_0 = arith.constant 0 : i32
    %c0_i32_1 = arith.constant 0 : i32
    return %c0_i32, %c0_i32_0 : i32, i32
  }
  func.func @transform_6(%arg0: i32, %arg1: i32) -> (i32, i32) {
    %c0_i32 = arith.constant 0 : i32
    %c0_i32_0 = arith.constant 0 : i32
    %c0_i32_1 = arith.constant 0 : i32
    return %c0_i32, %c0_i32_0 : i32, i32
  }
  func.func @transform_7(%arg0: i32, %arg1: i32) -> (i32, i32) {
    %c0_i32 = arith.constant 0 : i32
    %c0_i32_0 = arith.constant 0 : i32
    return %arg0, %c0_i32 : i32, i32
  }
}

</mosaic_0001>

<llo_original>
// kernel: tpu_custom_call.1
$region0: #{tpu_custom_call.1}
  #allocation0 [shape = 'u32[]', space=smem, size = 0x4, offset = 0x4, fixed_abs, tag = 'smem constant byte address 0x4 - core index']
  #allocation1 [shape = 'u32[144,128]{1,0:T(1,128)}', space=vmem, size = 0x12000, scoped, tag = 'internal scratch']
  #allocation2 [shape = 'f32[16,128]{1,0:T(8,128)}', space=vmem, size = 0x2000, scoped, tag = 'scratch operand']
  #allocation3 [shape = 'f32[16,128]{1,0:T(8,128)}', space=vmem, size = 0x2000, scoped, tag = 'scratch operand']
  %s0 = inlined_call_operand.hbm [shape: bf16[8,16,128], index: 0, kind: input, shape index: {}]
  %s1 = inlined_call_operand.hbm [shape: bf16[16,128], index: 1, kind: input, shape index: {}]
  %s2 = inlined_call_operand.hbm [shape: bf16[128,512], index: 2, kind: input, shape index: {}]
  %s3 = inlined_call_operand.hbm [shape: bf16[128,512], index: 3, kind: input, shape index: {}]
  %s4 = inlined_call_operand.hbm [shape: bf16[256,512], index: 4, kind: input, shape index: {}]
  %s5 = inlined_call_operand.hbm [shape: bf16[128,128], index: 5, kind: input, shape index: {}]
  %s6 = inlined_call_operand.vmem [shape: f32[1,128], index: 6, kind: input, shape index: {}]
  %s7 = inlined_call_operand.hbm [shape: f32[16,128], index: 7, kind: output, shape index: {}]
  %s8 = sld [smem:[#allocation0]]
  $region70: #{tpu_custom_call.1} parent=0
    _
  %s10 = ssub.s32 1, %s8
  %s11 = scalar_select 0, %s10, %s8
  $region1: #{tpu_custom_call.1} parent=0
    #allocation4 [shape = 'u8[32768]{0}', space=vmem, size = 0x8000, scoped, tag = 'input window, operand 0, single buffered']
    #allocation5 [shape = 's32[1]{0}', space=sflag, size = 0x4, scoped, tag = 'scoped memory for tpu_custom_call.1']
    #allocation6 [shape = 's32[1]{0}', space=sflag, size = 0x4, scoped, tag = 'scoped memory for tpu_custom_call.1']
    #allocation7 [shape = 'u8[4096]{0}', space=vmem, size = 0x1000, scoped, tag = 'input window, operand 1, single buffered']
    #allocation8 [shape = 's32[1]{0}', space=sflag, size = 0x4, scoped, tag = 'scoped memory for tpu_custom_call.1']
    #allocation9 [shape = 'u8[131072]{0}', space=vmem, size = 0x20000, scoped, tag = 'input window, operand 2, single buffered']
    #allocation10 [shape = 'u8[131072]{0}', space=vmem, size = 0x20000, scoped, tag = 'input window, operand 3, single buffered']
    #allocation11 [shape = 's32[1]{0}', space=sflag, size = 0x4, scoped, tag = 'scoped memory for tpu_custom_call.1']
    #allocation12 [shape = 'u8[262144]{0}', space=vmem, size = 0x40000, scoped, tag = 'input window, operand 4, single buffered']
    #allocation13 [shape = 'u8[32768]{0}', space=vmem, size = 0x8000, scoped, tag = 'input window, operand 5, single buffered']
    #allocation14 [shape = 's32[1]{0}', space=sflag, size = 0x4, scoped, tag = 'scoped memory for tpu_custom_call.1']
    #allocation15 [shape = 'u8[8192]{0}', space=vmem, size = 0x2000, scoped, tag = 'output window, operand 0, single buffered']
    %12 = vsyncpa [#allocation5], 0
    %13 = vsyncpa [#allocation8], 0
    %14 = vsyncpa [#allocation11], 0
    %15 = vsyncpa [#allocation14], 0
    %16 = vsyncpa [#allocation6], 0
    // Predicated region
    $region2: #{tpu_custom_call.1} parent=1 // pred_check
      _
    $region3: #{tpu_custom_call.1} parent=1 // pred_check_branch
      %18 = sbr.rel (0) target = $region5
    $region4: #{tpu_custom_call.1} parent=1 // pred_region
      %s20 = ssub.s32 1024, 1024
      %21 = vsyncadd [#allocation5], %s20
      %s22 = sshll.u32 [#allocation4], 4
      %s23 = int_to_ptr.vmem [resolvable:$true] %s22
      %28 = dma.hbm_to_vmem [thread:$0]  %s0, 1024, %s23, [#allocation5], 64, 64, 4
    $region5: #{tpu_custom_call.1} parent=1 // pred_fallthru
      _
    // Predicated region
    $region6: #{tpu_custom_call.1} parent=1 // pred_check
      _
    $region7: #{tpu_custom_call.1} parent=1 // pred_check_branch
      %30 = sbr.rel (0) target = $region9
    $region8: #{tpu_custom_call.1} parent=1 // pred_region
      %s32 = ssub.s32 128, 128
      %33 = vsyncadd [#allocation8], %s32
      %s34 = sshll.u32 [#allocation7], 4
      %s35 = int_to_ptr.vmem [resolvable:$true] %s34
      %40 = dma.hbm_to_vmem [thread:$0]  %s1, 128, %s35, [#allocation8], 64, 64, 4
    $region9: #{tpu_custom_call.1} parent=1 // pred_fallthru
      _
    // Predicated region
    $region10: #{tpu_custom_call.1} parent=1 // pred_check
      _
    $region11: #{tpu_custom_call.1} parent=1 // pred_check_branch
      %42 = sbr.rel (0) target = $region13
    $region12: #{tpu_custom_call.1} parent=1 // pred_region
      %s44 = ssub.s32 4096, 4096
      %45 = vsyncadd [#allocation8], %s44
      %s46 = sshll.u32 [#allocation9], 4
      %s47 = int_to_ptr.vmem [resolvable:$true] %s46
      %52 = dma.hbm_to_vmem [thread:$0]  %s2, 4096, %s47, [#allocation8], 256, 256, 16
    $region13: #{tpu_custom_call.1} parent=1 // pred_fallthru
      _
    // Predicated region
    $region14: #{tpu_custom_call.1} parent=1 // pred_check
      _
    $region15: #{tpu_custom_call.1} parent=1 // pred_check_branch
      %54 = sbr.rel (0) target = $region17
    $region16: #{tpu_custom_call.1} parent=1 // pred_region
      %s56 = ssub.s32 4096, 4096
      %57 = vsyncadd [#allocation11], %s56
      %s58 = sshll.u32 [#allocation10], 4
      %s59 = int_to_ptr.vmem [resolvable:$true] %s58
      %64 = dma.hbm_to_vmem [thread:$0]  %s3, 4096, %s59, [#allocation11], 256, 256, 16
    $region17: #{tpu_custom_call.1} parent=1 // pred_fallthru
      _
    // Predicated region
    $region18: #{tpu_custom_call.1} parent=1 // pred_check
      _
    $region19: #{tpu_custom_call.1} parent=1 // pred_check_branch
      %66 = sbr.rel (0) target = $region21
    $region20: #{tpu_custom_call.1} parent=1 // pred_region
      %s68 = ssub.s32 8192, 8192
      %69 = vsyncadd [#allocation11], %s68
      %s70 = sshll.u32 [#allocation12], 4
      %s71 = int_to_ptr.vmem [resolvable:$true] %s70
      %76 = dma.hbm_to_vmem [thread:$0]  %s4, 8192, %s71, [#allocation11], 256, 256, 16
    $region21: #{tpu_custom_call.1} parent=1 // pred_fallthru
      _
    // Predicated region
    $region22: #{tpu_custom_call.1} parent=1 // pred_check
      _
    $region23: #{tpu_custom_call.1} parent=1 // pred_check_branch
      %78 = sbr.rel (0) target = $region25
    $region24: #{tpu_custom_call.1} parent=1 // pred_region
      %s80 = ssub.s32 1024, 1024
      %81 = vsyncadd [#allocation14], %s80
      %s82 = sshll.u32 [#allocation13], 4
      %s83 = int_to_ptr.vmem [resolvable:$true] %s82
      %88 = dma.hbm_to_vmem [thread:$0]  %s5, 1024, %s83, [#allocation14], 64, 64, 4
    $region25: #{tpu_custom_call.1} parent=1 // pred_fallthru
      _
    // Predicated region
    $region26: #{tpu_custom_call.1} parent=1 // pred_check
      _
    $region27: #{tpu_custom_call.1} parent=1 // pred_check_branch
      %90 = sbr.rel (0) target = $region29
    $region28: #{tpu_custom_call.1} parent=1 // pred_region
      _
    $region29: #{tpu_custom_call.1} parent=1 // pred_fallthru
      _
    // Predicated region
    $region30: #{tpu_custom_call.1} parent=1 // pred_check
      _
    $region31: #{tpu_custom_call.1} parent=1 // pred_check_branch
      %92 = sbr.rel (0) target = $region33
    $region32: #{tpu_custom_call.1} parent=1 // pred_region
      %93 = dma.done [#allocation5], 1024
    $region33: #{tpu_custom_call.1} parent=1 // pred_fallthru
      _
    // Predicated region
    $region34: #{tpu_custom_call.1} parent=1 // pred_check
      _
    $region35: #{tpu_custom_call.1} parent=1 // pred_check_branch
      %95 = sbr.rel (0) target = $region37
    $region36: #{tpu_custom_call.1} parent=1 // pred_region
      %96 = dma.done [#allocation8], 128
    $region37: #{tpu_custom_call.1} parent=1 // pred_fallthru
      _
    // Predicated region
    $region38: #{tpu_custom_call.1} parent=1 // pred_check
      _
    $region39: #{tpu_custom_call.1} parent=1 // pred_check_branch
      %98 = sbr.rel (0) target = $region41
    $region40: #{tpu_custom_call.1} parent=1 // pred_region
      %99 = dma.done [#allocation8], 4096
    $region41: #{tpu_custom_call.1} parent=1 // pred_fallthru
      _
    // Predicated region
    $region42: #{tpu_custom_call.1} parent=1 // pred_check
      _
    $region43: #{tpu_custom_call.1} parent=1 // pred_check_branch
      %101 = sbr.rel (0) target = $region45
    $region44: #{tpu_custom_call.1} parent=1 // pred_region
      %102 = dma.done [#allocation11], 4096
    $region45: #{tpu_custom_call.1} parent=1 // pred_fallthru
      _
    // Predicated region
    $region46: #{tpu_custom_call.1} parent=1 // pred_check
      _
    $region47: #{tpu_custom_call.1} parent=1 // pred_check_branch
      %104 = sbr.rel (0) target = $region49
    $region48: #{tpu_custom_call.1} parent=1 // pred_region
      %105 = dma.done [#allocation11], 8192
    $region49: #{tpu_custom_call.1} parent=1 // pred_fallthru
      _
    // Predicated region
    $region50: #{tpu_custom_call.1} parent=1 // pred_check
      _
    $region51: #{tpu_custom_call.1} parent=1 // pred_check_branch
      %107 = sbr.rel (0) target = $region53
    $region52: #{tpu_custom_call.1} parent=1 // pred_region
      %108 = dma.done [#allocation14], 1024
    $region53: #{tpu_custom_call.1} parent=1 // pred_fallthru
      _
    %p110 = scmp.eq.s32.totalorder 0, 0
    // Predicated region
    $region54: #{tpu_custom_call.1} parent=1 // pred_check
      %p111 = pneg %p110
    $region55: #{tpu_custom_call.1} parent=1 // pred_check_branch
      %113 = sbr.rel (%p111) target = $region57
    $region56: #{tpu_custom_call.1} parent=1 // pred_region
      %114 = vst [vmem:[#allocation2] sm:$0xff] 0.0
      %115 = vst [vmem:[#allocation2 + $0x8] sm:$0xff] 0.0
      %116 = vst [vmem:[#allocation3] sm:$0xff] 0.0
      %117 = vst [vmem:[#allocation3 + $0x8] sm:$0xff] 0.0
    $region57: #{tpu_custom_call.1} parent=1 // pred_fallthru
      _
    %v118 = vld [vmem:[#allocation4] sm:$0xf]
    %v119 = vld [vmem:[#allocation4 + $0x4] sm:$0xf]
    %v120 = vld [vmem:[#allocation4 + $0x8] sm:$0xf]
    %v121 = vld [vmem:[#allocation4 + $0xc] sm:$0xf]
    %v122 = vld [vmem:[#allocation4 + $0x10] sm:$0xf]
    %v123 = vld [vmem:[#allocation4 + $0x14] sm:$0xf]
    %v124 = vld [vmem:[#allocation4 + $0x18] sm:$0xf]
    %v125 = vld [vmem:[#allocation4 + $0x1c] sm:$0xf]
    %v126 = vld [vmem:[#allocation4 + $0x20] sm:$0xf]
    %v127 = vld [vmem:[#allocation4 + $0x24] sm:$0xf]
    %v128 = vld [vmem:[#allocation4 + $0x28] sm:$0xf]
    %v129 = vld [vmem:[#allocation4 + $0x2c] sm:$0xf]
    %v130 = vld [vmem:[#allocation4 + $0x30] sm:$0xf]
    %v131 = vld [vmem:[#allocation4 + $0x34] sm:$0xf]
    %v132 = vld [vmem:[#allocation4 + $0x38] sm:$0xf]
    %v133 = vld [vmem:[#allocation4 + $0x3c] sm:$0xf]
    %v134 = vld [vmem:[#allocation9] sm:$0xff]
    %v135 = vld [vmem:[#allocation9 + $0x8] sm:$0xff]
    %v136 = vld [vmem:[#allocation9 + $0x10] sm:$0xff]
    %v137 = vld [vmem:[#allocation9 + $0x18] sm:$0xff]
    %v138 = vld [vmem:[#allocation9 + $0x20] sm:$0xff]
    %v139 = vld [vmem:[#allocation9 + $0x28] sm:$0xff]
    %v140 = vld [vmem:[#allocation9 + $0x30] sm:$0xff]
    %v141 = vld [vmem:[#allocation9 + $0x38] sm:$0xff]
    %v142 = vld [vmem:[#allocation9 + $0x40] sm:$0xff]
    %v143 = vld [vmem:[#allocation9 + $0x48] sm:$0xff]
    %v144 = vld [vmem:[#allocation9 + $0x50] sm:$0xff]
    %v145 = vld [vmem:[#allocation9 + $0x58] sm:$0xff]
    %v146 = vld [vmem:[#allocation9 + $0x60] sm:$0xff]
    %v147 = vld [vmem:[#allocation9 + $0x68] sm:$0xff]
    %v148 = vld [vmem:[#allocation9 + $0x70] sm:$0xff]
    %v149 = vld [vmem:[#allocation9 + $0x78] sm:$0xff]
    %v150 = vld [vmem:[#allocation9 + $0x80] sm:$0xff]
    %v151 = vld [vmem:[#allocation9 + $0x88] sm:$0xff]
    %v152 = vld [vmem:[#allocation9 + $0x90] sm:$0xff]
    %v153 = vld [vmem:[#allocation9 + $0x98] sm:$0xff]
    %v154 = vld [vmem:[#allocation9 + $0xa0] sm:$0xff]
    %v155 = vld [vmem:[#allocation9 + $0xa8] sm:$0xff]
    %v156 = vld [vmem:[#allocation9 + $0xb0] sm:$0xff]
    %v157 = vld [vmem:[#allocation9 + $0xb8] sm:$0xff]
    %v158 = vld [vmem:[#allocation9 + $0xc0] sm:$0xff]
    %v159 = vld [vmem:[#allocation9 + $0xc8] sm:$0xff]
    %v160 = vld [vmem:[#allocation9 + $0xd0] sm:$0xff]
    %v161 = vld [vmem:[#allocation9 + $0xd8] sm:$0xff]
    %v162 = vld [vmem:[#allocation9 + $0xe0] sm:$0xff]
    %v163 = vld [vmem:[#allocation9 + $0xe8] sm:$0xff]
    %v164 = vld [vmem:[#allocation9 + $0xf0] sm:$0xff]
    %v165 = vld [vmem:[#allocation9 + $0xf8] sm:$0xff]
    %v182 = vunpack.c.l.b16 %v118
    %v183 = vunpack.c.l.b16 %v119
    %v184 = vunpack.c.l.b16 %v120
    %v185 = vunpack.c.l.b16 %v121
    %v186 = vunpack.c.l.b16 %v122
    %v187 = vunpack.c.l.b16 %v123
    %v188 = vunpack.c.l.b16 %v124
    %v189 = vunpack.c.l.b16 %v125
    %v190 = vunpack.c.l.b16 %v126
    %v191 = vunpack.c.l.b16 %v127
    %v192 = vunpack.c.l.b16 %v128
    %v193 = vunpack.c.l.b16 %v129
    %v194 = vunpack.c.l.b16 %v130
    %v195 = vunpack.c.l.b16 %v131
    %v196 = vunpack.c.l.b16 %v132
    %v197 = vunpack.c.l.b16 %v133
    %v198 = vpack.c.b16 %v183, %v182
    %v199 = vpack.c.b16 %v185, %v184
    %v200 = vpack.c.b16 %v187, %v186
    %v201 = vpack.c.b16 %v189, %v188
    %v202 = vpack.c.b16 %v191, %v190
    %v203 = vpack.c.b16 %v193, %v192
    %v204 = vpack.c.b16 %v195, %v194
    %v205 = vpack.c.b16 %v197, %v196
    %v246 = vunpack.c.l.b16 %v134
    %v247 = vunpack.c.h.b16 %v134
    %v248 = vunpack.c.l.b16 %v135
    %v249 = vunpack.c.h.b16 %v135
    %v250 = vunpack.c.l.b16 %v136
    %v251 = vunpack.c.h.b16 %v136
    %v252 = vunpack.c.l.b16 %v137
    %v253 = vunpack.c.h.b16 %v137
    %v254 = vunpack.c.l.b16 %v138
    %v255 = vunpack.c.h.b16 %v138
    %v256 = vunpack.c.l.b16 %v139
    %v257 = vunpack.c.h.b16 %v139
    %v258 = vunpack.c.l.b16 %v140
    %v259 = vunpack.c.h.b16 %v140
    %v260 = vunpack.c.l.b16 %v141
    %v261 = vunpack.c.h.b16 %v141
    %v262 = vunpack.c.l.b16 %v142
    %v263 = vunpack.c.h.b16 %v142
    %v264 = vunpack.c.l.b16 %v143
    %v265 = vunpack.c.h.b16 %v143
    %v266 = vunpack.c.l.b16 %v144
    %v267 = vunpack.c.h.b16 %v144
    %v268 = vunpack.c.l.b16 %v145
    %v269 = vunpack.c.h.b16 %v145
    %v270 = vunpack.c.l.b16 %v146
    %v271 = vunpack.c.h.b16 %v146
    %v272 = vunpack.c.l.b16 %v147
    %v273 = vunpack.c.h.b16 %v147
    %v274 = vunpack.c.l.b16 %v148
    %v275 = vunpack.c.h.b16 %v148
    %v276 = vunpack.c.l.b16 %v149
    %v277 = vunpack.c.h.b16 %v149
    %v278 = vunpack.c.l.b16 %v150
    %v279 = vunpack.c.h.b16 %v150
    %v280 = vunpack.c.l.b16 %v151
    %v281 = vunpack.c.h.b16 %v151
    %v282 = vunpack.c.l.b16 %v152
    %v283 = vunpack.c.h.b16 %v152
    %v284 = vunpack.c.l.b16 %v153
    %v285 = vunpack.c.h.b16 %v153
    %v286 = vunpack.c.l.b16 %v154
    %v287 = vunpack.c.h.b16 %v154
    %v288 = vunpack.c.l.b16 %v155
    %v289 = vunpack.c.h.b16 %v155
    %v290 = vunpack.c.l.b16 %v156
    %v291 = vunpack.c.h.b16 %v156
    %v292 = vunpack.c.l.b16 %v157
    %v293 = vunpack.c.h.b16 %v157
    %v294 = vunpack.c.l.b16 %v158
    %v295 = vunpack.c.h.b16 %v158
    %v296 = vunpack.c.l.b16 %v159
    %v297 = vunpack.c.h.b16 %v159
    %v298 = vunpack.c.l.b16 %v160
    %v299 = vunpack.c.h.b16 %v160
    %v300 = vunpack.c.l.b16 %v161
    %v301 = vunpack.c.h.b16 %v161
    %v302 = vunpack.c.l.b16 %v162
    %v303 = vunpack.c.h.b16 %v162
    %v304 = vunpack.c.l.b16 %v163
    %v305 = vunpack.c.h.b16 %v163
    %v306 = vunpack.c.l.b16 %v164
    %v307 = vunpack.c.h.b16 %v164
    %v308 = vunpack.c.l.b16 %v165
    %v309 = vunpack.c.h.b16 %v165
    %v310 = vpack.c.b16 %v250, %v246
    %v311 = vpack.c.b16 %v251, %v247
    %v312 = vpack.c.b16 %v252, %v248
    %v313 = vpack.c.b16 %v253, %v249
    %v314 = vpack.c.b16 %v258, %v254
    %v315 = vpack.c.b16 %v259, %v255
    %v316 = vpack.c.b16 %v260, %v256
    %v317 = vpack.c.b16 %v261, %v257
    %v318 = vpack.c.b16 %v266, %v262
    %v319 = vpack.c.b16 %v267, %v263
    %v320 = vpack.c.b16 %v268, %v264
    %v321 = vpack.c.b16 %v269, %v265
    %v322 = vpack.c.b16 %v274, %v270
    %v323 = vpack.c.b16 %v275, %v271
    %v324 = vpack.c.b16 %v276, %v272
    %v325 = vpack.c.b16 %v277, %v273
    %v326 = vpack.c.b16 %v282, %v278
    %v327 = vpack.c.b16 %v283, %v279
    %v328 = vpack.c.b16 %v284, %v280
    %v329 = vpack.c.b16 %v285, %v281
    %v330 = vpack.c.b16 %v290, %v286
    %v331 = vpack.c.b16 %v291, %v287
    %v332 = vpack.c.b16 %v292, %v288
    %v333 = vpack.c.b16 %v293, %v289
    %v334 = vpack.c.b16 %v298, %v294
    %v335 = vpack.c.b16 %v299, %v295
    %v336 = vpack.c.b16 %v300, %v296
    %v337 = vpack.c.b16 %v301, %v297
    %v338 = vpack.c.b16 %v306, %v302
    %v339 = vpack.c.b16 %v307, %v303
    %v340 = vpack.c.b16 %v308, %v304
    %v341 = vpack.c.b16 %v309, %v305
    %374 = vmatprep.subr.bf16.mxu0 %v311
    %375 = vmatpush1.bf16.msra.mxu0 %v310
    %376 = vmatprep.subr.bf16.mxu0 %v315
    %377 = vmatpush1.bf16.msra.mxu0 %v314
    %378 = vmatprep.subr.bf16.mxu0 %v319
    %379 = vmatpush1.bf16.msra.mxu0 %v318
    %380 = vmatprep.subr.bf16.mxu0 %v323
    %381 = vmatpush1.bf16.msra.mxu0 %v322
    %382 = vmatprep.subr.bf16.mxu0 %v327
    %383 = vmatpush1.bf16.msra.mxu0 %v326
    %384 = vmatprep.subr.bf16.mxu0 %v331
    %385 = vmatpush1.bf16.msra.mxu0 %v330
    %386 = vmatprep.subr.bf16.mxu0 %v335
    %387 = vmatpush1.bf16.msra.mxu0 %v334
    %388 = vmatprep.subr.bf16.mxu0 %v339
    %389 = vmatpush1.bf16.msra.mxu0 %v338
    %390 = vmatprep.subr.bf16.mxu0 0
    %391 = vmatpush1.bf16.msra.mxu0 0
    %392 = vmatprep.subr.bf16.mxu0 0
    %393 = vmatpush1.bf16.msra.mxu0 0
    %394 = vmatprep.subr.bf16.mxu0 0
    %395 = vmatpush1.bf16.msra.mxu0 0
    %396 = vmatprep.subr.bf16.mxu0 0
    %397 = vmatpush1.bf16.msra.mxu0 0
    %398 = vmatprep.subr.bf16.mxu0 0
    %399 = vmatpush1.bf16.msra.mxu0 0
    %400 = vmatprep.subr.bf16.mxu0 0
    %401 = vmatpush1.bf16.msra.mxu0 0
    %402 = vmatprep.subr.bf16.mxu0 0
    %403 = vmatpush1.bf16.msra.mxu0 0
    %404 = vmatprep.subr.bf16.mxu0 0
    %405 = vmatpush1.bf16.msra.mxu0 0
    %406 = vmatprep.mubr.bf16.mxu0 0
    %407 = vmatmul.mubr.bf16.gmra.mrb[0].mxu0 %v198
    %v408 = vpop.f32.mrb[0].mxu0
    %v409 = vadd.f32 0.0, %v408
    %v410 = vpop.f32.mrb[0].mxu0
    %v411 = vadd.f32 0.0, %v410
    %v412 = vpop.f32.mrb[0].mxu0
    %v413 = vadd.f32 0.0, %v412
    %v414 = vpop.f32.mrb[0].mxu0
    %v415 = vadd.f32 0.0, %v414
    %416 = vmatprep.mubr.bf16.mxu0 0
    %417 = vmatmul.mubr.bf16.gmra.mrb[0].mxu0 %v199
    %v418 = vpop.f32.mrb[0].mxu0
    %v419 = vadd.f32 0.0, %v418
    %v420 = vpop.f32.mrb[0].mxu0
    %v421 = vadd.f32 0.0, %v420
    %v422 = vpop.f32.mrb[0].mxu0
    %v423 = vadd.f32 0.0, %v422
    %v424 = vpop.f32.mrb[0].mxu0
    %v425 = vadd.f32 0.0, %v424
    %426 = vmatprep.mubr.bf16.mxu0 0
    %427 = vmatmul.mubr.bf16.gmra.mrb[0].mxu0 %v200
    %v428 = vpop.f32.mrb[0].mxu0
    %v429 = vadd.f32 0.0, %v428
    %v430 = vpop.f32.mrb[0].mxu0
    %v431 = vadd.f32 0.0, %v430
    %v432 = vpop.f32.mrb[0].mxu0
    %v433 = vadd.f32 0.0, %v432
    %v434 = vpop.f32.mrb[0].mxu0
    %v435 = vadd.f32 0.0, %v434
    %436 = vmatprep.mubr.bf16.mxu0 0
    %437 = vmatmul.mubr.bf16.gmra.mrb[0].mxu0 %v201
    %v438 = vpop.f32.mrb[0].mxu0
    %v439 = vadd.f32 0.0, %v438
    %v440 = vpop.f32.mrb[0].mxu0
    %v441 = vadd.f32 0.0, %v440
    %v442 = vpop.f32.mrb[0].mxu0
    %v443 = vadd.f32 0.0, %v442
    %v444 = vpop.f32.mrb[0].mxu0
    %v445 = vadd.f32 0.0, %v444
    %446 = vmatprep.mubr.bf16.mxu0 0
    %447 = vmatmul.mubr.bf16.gmra.mrb[0].mxu0 %v202
    %v448 = vpop.f32.mrb[0].mxu0
    %v449 = vadd.f32 0.0, %v448
    %v450 = vpop.f32.mrb[0].mxu0
    %v451 = vadd.f32 0.0, %v450
    %v452 = vpop.f32.mrb[0].mxu0
    %v453 = vadd.f32 0.0, %v452
    %v454 = vpop.f32.mrb[0].mxu0
    %v455 = vadd.f32 0.0, %v454
    %456 = vmatprep.mubr.bf16.mxu0 0
    %457 = vmatmul.mubr.bf16.gmra.mrb[0].mxu0 %v203
    %v458 = vpop.f32.mrb[0].mxu0
    %v459 = vadd.f32 0.0, %v458
    %v460 = vpop.f32.mrb[0].mxu0
    %v461 = vadd.f32 0.0, %v460
    %v462 = vpop.f32.mrb[0].mxu0
    %v463 = vadd.f32 0.0, %v462
    %v464 = vpop.f32.mrb[0].mxu0
    %v465 = vadd.f32 0.0, %v464
    %466 = vmatprep.mubr.bf16.mxu0 0
    %467 = vmatmul.mubr.bf16.gmra.mrb[0].mxu0 %v204
    %v468 = vpop.f32.mrb[0].mxu0
    %v469 = vadd.f32 0.0, %v468
    %v470 = vpop.f32.mrb[0].mxu0
    %v471 = vadd.f32 0.0, %v470
    %v472 = vpop.f32.mrb[0].mxu0
    %v473 = vadd.f32 0.0, %v472
    %v474 = vpop.f32.mrb[0].mxu0
    %v475 = vadd.f32 0.0, %v474
    %476 = vmatprep.mubr.bf16.mxu0 0
    %477 = vmatmul.mubr.bf16.gmra.mrb[0].mxu0 %v205
    %v478 = vpop.f32.mrb[0].mxu0
    %v479 = vadd.f32 0.0, %v478
    %v480 = vpop.f32.mrb[0].mxu0
    %v481 = vadd.f32 0.0, %v480
    %v482 = vpop.f32.mrb[0].mxu0
    %v483 = vadd.f32 0.0, %v482
    %v484 = vpop.f32.mrb[0].mxu0
    %v485 = vadd.f32 0.0, %v484
    %486 = vdwg.mxu0
    %487 = vmatprep.subr.bf16.mxu0 %v313
    %488 = vmatpush1.bf16.msra.mxu0 %v312
    %489 = vmatprep.subr.bf16.mxu0 %v317
    %490 = vmatpush1.bf16.msra.mxu0 %v316
    %491 = vmatprep.subr.bf16.mxu0 %v321
    %492 = vmatpush1.bf16.msra.mxu0 %v320
    %493 = vmatprep.subr.bf16.mxu0 %v325
    %494 = vmatpush1.bf16.msra.mxu0 %v324
    %495 = vmatprep.subr.bf16.mxu0 %v329
    %496 = vmatpush1.bf16.msra.mxu0 %v328
    %497 = vmatprep.subr.bf16.mxu0 %v333
    %498 = vmatpush1.bf16.msra.mxu0 %v332
    %499 = vmatprep.subr.bf16.mxu0 %v337
    %500 = vmatpush1.bf16.msra.mxu0 %v336
    %501 = vmatprep.subr.bf16.mxu0 %v341
    %502 = vmatpush1.bf16.msra.mxu0 %v340
    %503 = vmatprep.subr.bf16.mxu0 0
    %504 = vmatpush1.bf16.msra.mxu0 0
    %505 = vmatprep.subr.bf16.mxu0 0
    %506 = vmatpush1.bf16.msra.mxu0 0
    %507 = vmatprep.subr.bf16.mxu0 0
    %508 = vmatpush1.bf16.msra.mxu0 0
    %509 = vmatprep.subr.bf16.mxu0 0
    %510 = vmatpush1.bf16.msra.mxu0 0
    %511 = vmatprep.subr.bf16.mxu0 0
    %512 = vmatpush1.bf16.msra.mxu0 0
    %513 = vmatprep.subr.bf16.mxu0 0
    %514 = vmatpush1.bf16.msra.mxu0 0
    %515 = vmatprep.subr.bf16.mxu0 0
    %516 = vmatpush1.bf16.msra.mxu0 0
    %517 = vmatprep.subr.bf16.mxu0 0
    %518 = vmatpush1.bf16.msra.mxu0 0
    %519 = vmatprep.mubr.bf16.mxu0 0
    %520 = vmatmul.mubr.bf16.gmra.mrb[0].mxu0 %v198
    %v521 = vpop.f32.mrb[0].mxu0
    %v522 = vadd.f32 0.0, %v521
    %v523 = vpop.f32.mrb[0].mxu0
    %v524 = vadd.f32 0.0, %v523
    %v525 = vpop.f32.mrb[0].mxu0
    %v526 = vadd.f32 0.0, %v525
    %v527 = vpop.f32.mrb[0].mxu0
    %v528 = vadd.f32 0.0, %v527
    %529 = vmatprep.mubr.bf16.mxu0 0
    %530 = vmatmul.mubr.bf16.gmra.mrb[0].mxu0 %v199
    %v531 = vpop.f32.mrb[0].mxu0
    %v532 = vadd.f32 0.0, %v531
    %v533 = vpop.f32.mrb[0].mxu0
    %v534 = vadd.f32 0.0, %v533
    %v535 = vpop.f32.mrb[0].mxu0
    %v536 = vadd.f32 0.0, %v535
    %v537 = vpop.f32.mrb[0].mxu0
    %v538 = vadd.f32 0.0, %v537
    %539 = vmatprep.mubr.bf16.mxu0 0
    %540 = vmatmul.mubr.bf16.gmra.mrb[0].mxu0 %v200
    %v541 = vpop.f32.mrb[0].mxu0
    %v542 = vadd.f32 0.0, %v541
    %v543 = vpop.f32.mrb[0].mxu0
    %v544 = vadd.f32 0.0, %v543
    %v545 = vpop.f32.mrb[0].mxu0
    %v546 = vadd.f32 0.0, %v545
    %v547 = vpop.f32.mrb[0].mxu0
    %v548 = vadd.f32 0.0, %v547
    %549 = vmatprep.mubr.bf16.mxu0 0
    %550 = vmatmul.mubr.bf16.gmra.mrb[0].mxu0 %v201
    %v551 = vpop.f32.mrb[0].mxu0
    %v552 = vadd.f32 0.0, %v551
    %v553 = vpop.f32.mrb[0].mxu0
    %v554 = vadd.f32 0.0, %v553
    %v555 = vpop.f32.mrb[0].mxu0
    %v556 = vadd.f32 0.0, %v555
    %v557 = vpop.f32.mrb[0].mxu0
    %v558 = vadd.f32 0.0, %v557
    %559 = vmatprep.mubr.bf16.mxu0 0
    %560 = vmatmul.mubr.bf16.gmra.mrb[0].mxu0 %v202
    %v561 = vpop.f32.mrb[0].mxu0
    %v562 = vadd.f32 0.0, %v561
    %v563 = vpop.f32.mrb[0].mxu0
    %v564 = vadd.f32 0.0, %v563
    %v565 = vpop.f32.mrb[0].mxu0
    %v566 = vadd.f32 0.0, %v565
    %v567 = vpop.f32.mrb[0].mxu0
    %v568 = vadd.f32 0.0, %v567
    %569 = vmatprep.mubr.bf16.mxu0 0
    %570 = vmatmul.mubr.bf16.gmra.mrb[0].mxu0 %v203
    %v571 = vpop.f32.mrb[0].mxu0
    %v572 = vadd.f32 0.0, %v571
    %v573 = vpop.f32.mrb[0].mxu0
    %v574 = vadd.f32 0.0, %v573
    %v575 = vpop.f32.mrb[0].mxu0
    %v576 = vadd.f32 0.0, %v575
    %v577 = vpop.f32.mrb[0].mxu0
    %v578 = vadd.f32 0.0, %v577
    %579 = vmatprep.mubr.bf16.mxu0 0
    %580 = vmatmul.mubr.bf16.gmra.mrb[0].mxu0 %v204
    %v581 = vpop.f32.mrb[0].mxu0
    %v582 = vadd.f32 0.0, %v581
    %v583 = vpop.f32.mrb[0].mxu0
    %v584 = vadd.f32 0.0, %v583
    %v585 = vpop.f32.mrb[0].mxu0
    %v586 = vadd.f32 0.0, %v585
    %v587 = vpop.f32.mrb[0].mxu0
    %v588 = vadd.f32 0.0, %v587
    %589 = vmatprep.mubr.bf16.mxu0 0
    %590 = vmatmul.mubr.bf16.gmra.mrb[0].mxu0 %v205
    %v591 = vpop.f32.mrb[0].mxu0
    %v592 = vadd.f32 0.0, %v591
    %v593 = vpop.f32.mrb[0].mxu0
    %v594 = vadd.f32 0.0, %v593
    %v595 = vpop.f32.mrb[0].mxu0
    %v596 = vadd.f32 0.0, %v595
    %v597 = vpop.f32.mrb[0].mxu0
    %v598 = vadd.f32 0.0, %v597
    %599 = vdwg.mxu0
    %v600 = vld [vmem:[#allocation2] sm:$0xff]
    %v601 = vld [vmem:[#allocation2 + $0x8] sm:$0xff]
    %v602 = vld [vmem:[#allocation3] sm:$0xff]
    %v603 = vld [vmem:[#allocation3 + $0x8] sm:$0xff]
    %v604 = vpack.c.bf16 %v601, %v600
    %v605 = vld [vmem:[#allocation10] sm:$0xff]
    %v606 = vld [vmem:[#allocation10 + $0x8] sm:$0xff]
    %v607 = vld [vmem:[#allocation10 + $0x10] sm:$0xff]
    %v608 = vld [vmem:[#allocation10 + $0x18] sm:$0xff]
    %v609 = vld [vmem:[#allocation10 + $0x20] sm:$0xff]
    %v610 = vld [vmem:[#allocation10 + $0x28] sm:$0xff]
    %v611 = vld [vmem:[#allocation10 + $0x30] sm:$0xff]
    %v612 = vld [vmem:[#allocation10 + $0x38] sm:$0xff]
    %v613 = vld [vmem:[#allocation10 + $0x40] sm:$0xff]
    %v614 = vld [vmem:[#allocation10 + $0x48] sm:$0xff]
    %v615 = vld [vmem:[#allocation10 + $0x50] sm:$0xff]
    %v616 = vld [vmem:[#allocation10 + $0x58] sm:$0xff]
    %v617 = vld [vmem:[#allocation10 + $0x60] sm:$0xff]
    %v618 = vld [vmem:[#allocation10 + $0x68] sm:$0xff]
    %v619 = vld [vmem:[#allocation10 + $0x70] sm:$0xff]
    %v620 = vld [vmem:[#allocation10 + $0x78] sm:$0xff]
    %v621 = vld [vmem:[#allocation10 + $0x80] sm:$0xff]
    %v622 = vld [vmem:[#allocation10 + $0x88] sm:$0xff]
    %v623 = vld [vmem:[#allocation10 + $0x90] sm:$0xff]
    %v624 = vld [vmem:[#allocation10 + $0x98] sm:$0xff]
    %v625 = vld [vmem:[#allocation10 + $0xa0] sm:$0xff]
    %v626 = vld [vmem:[#allocation10 + $0xa8] sm:$0xff]
    %v627 = vld [vmem:[#allocation10 + $0xb0] sm:$0xff]
    %v628 = vld [vmem:[#allocation10 + $0xb8] sm:$0xff]
    %v629 = vld [vmem:[#allocation10 + $0xc0] sm:$0xff]
    %v630 = vld [vmem:[#allocation10 + $0xc8] sm:$0xff]
    %v631 = vld [vmem:[#allocation10 + $0xd0] sm:$0xff]
    %v632 = vld [vmem:[#allocation10 + $0xd8] sm:$0xff]
    %v633 = vld [vmem:[#allocation10 + $0xe0] sm:$0xff]
    %v634 = vld [vmem:[#allocation10 + $0xe8] sm:$0xff]
    %v635 = vld [vmem:[#allocation10 + $0xf0] sm:$0xff]
    %v636 = vld [vmem:[#allocation10 + $0xf8] sm:$0xff]
    %v669 = vunpack.c.l.b16 %v605
    %v670 = vunpack.c.h.b16 %v605
    %v671 = vunpack.c.l.b16 %v606
    %v672 = vunpack.c.h.b16 %v606
    %v673 = vunpack.c.l.b16 %v607
    %v674 = vunpack.c.h.b16 %v607
    %v675 = vunpack.c.l.b16 %v608
    %v676 = vunpack.c.h.b16 %v608
    %v677 = vunpack.c.l.b16 %v609
    %v678 = vunpack.c.h.b16 %v609
    %v679 = vunpack.c.l.b16 %v610
    %v680 = vunpack.c.h.b16 %v610
    %v681 = vunpack.c.l.b16 %v611
    %v682 = vunpack.c.h.b16 %v611
    %v683 = vunpack.c.l.b16 %v612
    %v684 = vunpack.c.h.b16 %v612
    %v685 = vunpack.c.l.b16 %v613
    %v686 = vunpack.c.h.b16 %v613
    %v687 = vunpack.c.l.b16 %v614
    %v688 = vunpack.c.h.b16 %v614
    %v689 = vunpack.c.l.b16 %v615
    %v690 = vunpack.c.h.b16 %v615
    %v691 = vunpack.c.l.b16 %v616
    %v692 = vunpack.c.h.b16 %v616
    %v693 = vunpack.c.l.b16 %v617
    %v694 = vunpack.c.h.b16 %v617
    %v695 = vunpack.c.l.b16 %v618
    %v696 = vunpack.c.h.b16 %v618
    %v697 = vunpack.c.l.b16 %v619
    %v698 = vunpack.c.h.b16 %v619
    %v699 = vunpack.c.l.b16 %v620
    %v700 = vunpack.c.h.b16 %v620
    %v701 = vunpack.c.l.b16 %v621
    %v702 = vunpack.c.h.b16 %v621
    %v703 = vunpack.c.l.b16 %v622
    %v704 = vunpack.c.h.b16 %v622
    %v705 = vunpack.c.l.b16 %v623
    %v706 = vunpack.c.h.b16 %v623
    %v707 = vunpack.c.l.b16 %v624
    %v708 = vunpack.c.h.b16 %v624
    %v709 = vunpack.c.l.b16 %v625
    %v710 = vunpack.c.h.b16 %v625
    %v711 = vunpack.c.l.b16 %v626
    %v712 = vunpack.c.h.b16 %v626
    %v713 = vunpack.c.l.b16 %v627
    %v714 = vunpack.c.h.b16 %v627
    %v715 = vunpack.c.l.b16 %v628
    %v716 = vunpack.c.h.b16 %v628
    %v717 = vunpack.c.l.b16 %v629
    %v718 = vunpack.c.h.b16 %v629
    %v719 = vunpack.c.l.b16 %v630
    %v720 = vunpack.c.h.b16 %v630
    %v721 = vunpack.c.l.b16 %v631
    %v722 = vunpack.c.h.b16 %v631
    %v723 = vunpack.c.l.b16 %v632
    %v724 = vunpack.c.h.b16 %v632
    %v725 = vunpack.c.l.b16 %v633
    %v726 = vunpack.c.h.b16 %v633
    %v727 = vunpack.c.l.b16 %v634
    %v728 = vunpack.c.h.b16 %v634
    %v729 = vunpack.c.l.b16 %v635
    %v730 = vunpack.c.h.b16 %v635
    %v731 = vunpack.c.l.b16 %v636
    %v732 = vunpack.c.h.b16 %v636
    %v733 = vpack.c.b16 %v673, %v669
    %v734 = vpack.c.b16 %v674, %v670
    %v735 = vpack.c.b16 %v675, %v671
    %v736 = vpack.c.b16 %v676, %v672
    %v737 = vpack.c.b16 %v681, %v677
    %v738 = vpack.c.b16 %v682, %v678
    %v739 = vpack.c.b16 %v683, %v679
    %v740 = vpack.c.b16 %v684, %v680
    %v741 = vpack.c.b16 %v689, %v685
    %v742 = vpack.c.b16 %v690, %v686
    %v743 = vpack.c.b16 %v691, %v687
    %v744 = vpack.c.b16 %v692, %v688
    %v745 = vpack.c.b16 %v697, %v693
    %v746 = vpack.c.b16 %v698, %v694
    %v747 = vpack.c.b16 %v699, %v695
    %v748 = vpack.c.b16 %v700, %v696
    %v749 = vpack.c.b16 %v705, %v701
    %v750 = vpack.c.b16 %v706, %v702
    %v751 = vpack.c.b16 %v707, %v703
    %v752 = vpack.c.b16 %v708, %v704
    %v753 = vpack.c.b16 %v713, %v709
    %v754 = vpack.c.b16 %v714, %v710
    %v755 = vpack.c.b16 %v715, %v711
    %v756 = vpack.c.b16 %v716, %v712
    %v757 = vpack.c.b16 %v721, %v717
    %v758 = vpack.c.b16 %v722, %v718
    %v759 = vpack.c.b16 %v723, %v719
    %v760 = vpack.c.b16 %v724, %v720
    %v761 = vpack.c.b16 %v729, %v725
    %v762 = vpack.c.b16 %v730, %v726
    %v763 = vpack.c.b16 %v731, %v727
    %v764 = vpack.c.b16 %v732, %v728
    %797 = vmatprep.subr.bf16.mxu0 %v734
    %798 = vmatpush1.bf16.msra.mxu0 %v733
    %799 = vmatprep.subr.bf16.mxu0 %v738
    %800 = vmatpush1.bf16.msra.mxu0 %v737
    %801 = vmatprep.subr.bf16.mxu0 %v742
    %802 = vmatpush1.bf16.msra.mxu0 %v741
    %803 = vmatprep.subr.bf16.mxu0 %v746
    %804 = vmatpush1.bf16.msra.mxu0 %v745
    %805 = vmatprep.subr.bf16.mxu0 %v750
    %806 = vmatpush1.bf16.msra.mxu0 %v749
    %807 = vmatprep.subr.bf16.mxu0 %v754
    %808 = vmatpush1.bf16.msra.mxu0 %v753
    %809 = vmatprep.subr.bf16.mxu0 %v758
    %810 = vmatpush1.bf16.msra.mxu0 %v757
    %811 = vmatprep.subr.bf16.mxu0 %v762
    %812 = vmatpush1.bf16.msra.mxu0 %v761
    %813 = vmatprep.subr.bf16.mxu0 0
    %814 = vmatpush1.bf16.msra.mxu0 0
    %815 = vmatprep.subr.bf16.mxu0 0
    %816 = vmatpush1.bf16.msra.mxu0 0
    %817 = vmatprep.subr.bf16.mxu0 0
    %818 = vmatpush1.bf16.msra.mxu0 0
    %819 = vmatprep.subr.bf16.mxu0 0
    %820 = vmatpush1.bf16.msra.mxu0 0
    %821 = vmatprep.subr.bf16.mxu0 0
    %822 = vmatpush1.bf16.msra.mxu0 0
    %823 = vmatprep.subr.bf16.mxu0 0
    %824 = vmatpush1.bf16.msra.mxu0 0
    %825 = vmatprep.subr.bf16.mxu0 0
    %826 = vmatpush1.bf16.msra.mxu0 0
    %827 = vmatprep.subr.bf16.mxu0 0
    %828 = vmatpush1.bf16.msra.mxu0 0
    %829 = vmatprep.mubr.bf16.mxu0 0
    %830 = vmatmul.mubr.bf16.gmra.mrb[0].mxu0 %v604
    %v831 = vpop.f32.mrb[0].mxu0
    %v832 = vadd.f32 0.0, %v831
    %v833 = vpop.f32.mrb[0].mxu0
    %v834 = vadd.f32 0.0, %v833
    %v835 = vpop.f32.mrb[0].mxu0
    %v836 = vadd.f32 0.0, %v835
    %v837 = vpop.f32.mrb[0].mxu0
    %v838 = vadd.f32 0.0, %v837
    %839 = vdwg.mxu0
    %840 = vmatprep.subr.bf16.mxu0 %v736
    %841 = vmatpush1.bf16.msra.mxu0 %v735
    %842 = vmatprep.subr.bf16.mxu0 %v740
    %843 = vmatpush1.bf16.msra.mxu0 %v739
    %844 = vmatprep.subr.bf16.mxu0 %v744
    %845 = vmatpush1.bf16.msra.mxu0 %v743
    %846 = vmatprep.subr.bf16.mxu0 %v748
    %847 = vmatpush1.bf16.msra.mxu0 %v747
    %848 = vmatprep.subr.bf16.mxu0 %v752
    %849 = vmatpush1.bf16.msra.mxu0 %v751
    %850 = vmatprep.subr.bf16.mxu0 %v756
    %851 = vmatpush1.bf16.msra.mxu0 %v755
    %852 = vmatprep.subr.bf16.mxu0 %v760
    %853 = vmatpush1.bf16.msra.mxu0 %v759
    %854 = vmatprep.subr.bf16.mxu0 %v764
    %855 = vmatpush1.bf16.msra.mxu0 %v763
    %856 = vmatprep.subr.bf16.mxu0 0
    %857 = vmatpush1.bf16.msra.mxu0 0
    %858 = vmatprep.subr.bf16.mxu0 0
    %859 = vmatpush1.bf16.msra.mxu0 0
    %860 = vmatprep.subr.bf16.mxu0 0
    %861 = vmatpush1.bf16.msra.mxu0 0
    %862 = vmatprep.subr.bf16.mxu0 0
    %863 = vmatpush1.bf16.msra.mxu0 0
    %864 = vmatprep.subr.bf16.mxu0 0
    %865 = vmatpush1.bf16.msra.mxu0 0
    %866 = vmatprep.subr.bf16.mxu0 0
    %867 = vmatpush1.bf16.msra.mxu0 0
    %868 = vmatprep.subr.bf16.mxu0 0
    %869 = vmatpush1.bf16.msra.mxu0 0
    %870 = vmatprep.subr.bf16.mxu0 0
    %871 = vmatpush1.bf16.msra.mxu0 0
    %872 = vmatprep.mubr.bf16.mxu0 0
    %873 = vmatmul.mubr.bf16.gmra.mrb[0].mxu0 %v604
    %v874 = vpop.f32.mrb[0].mxu0
    %v875 = vadd.f32 0.0, %v874
    %v876 = vpop.f32.mrb[0].mxu0
    %v877 = vadd.f32 0.0, %v876
    %v878 = vpop.f32.mrb[0].mxu0
    %v879 = vadd.f32 0.0, %v878
    %v880 = vpop.f32.mrb[0].mxu0
    %v881 = vadd.f32 0.0, %v880
    %882 = vdwg.mxu0
    %v883 = vadd.f32 %v409, %v832
    %v884 = vadd.f32 %v411, %v834
    %v885 = vadd.f32 %v522, %v875
    %v886 = vadd.f32 %v524, %v877
    %v887 = vadd.f32 %v413, %v836
    %v888 = vadd.f32 %v415, %v838
    %v889 = vadd.f32 %v526, %v879
    %v890 = vadd.f32 %v528, %v881
    %v891 = vxor.u32 %v883, 2147483648
    %v892 = vxor.u32 %v887, 2147483648
    %v893 = vmul.f32 %v891, 1.442695
    %v894 = vpow.pop %v893
    %v895 = vmul.f32 %v892, 1.442695
    %v896 = vpow.pop %v895
    %v897 = vadd.f32 %v894, 1.0
    %v898 = vadd.f32 %v896, 1.0
    %v899 = vrcp.pop %v897
    %v900 = vmul.f32 1.0, %v899
    %v901 = vrcp.pop %v898
    %v902 = vmul.f32 1.0, %v901
    %v903 = vxor.u32 %v884, 2147483648
    %v904 = vxor.u32 %v888, 2147483648
    %v905 = vmul.f32 %v903, 1.442695
    %v906 = vpow.pop %v905
    %v907 = vmul.f32 %v904, 1.442695
    %v908 = vpow.pop %v907
    %v909 = vadd.f32 %v906, 1.0
    %v910 = vadd.f32 %v908, 1.0
    %v911 = vrcp.pop %v909
    %v912 = vmul.f32 1.0, %v911
    %v913 = vrcp.pop %v910
    %v914 = vmul.f32 1.0, %v913
    %v915 = vtanh.pop %v885
    %v916 = vtanh.pop %v889
    %v917 = vxor.u32 %v886, 2147483648
    %v918 = vxor.u32 %v890, 2147483648
    %v919 = vmul.f32 %v917, 1.442695
    %v920 = vpow.pop %v919
    %v921 = vmul.f32 %v918, 1.442695
    %v922 = vpow.pop %v921
    %v923 = vadd.f32 %v920, 1.0
    %v924 = vadd.f32 %v922, 1.0
    %v925 = vrcp.pop %v923
    %v926 = vmul.f32 1.0, %v925
    %v927 = vrcp.pop %v924
    %v928 = vmul.f32 1.0, %v927
    %v929 = vmul.f32 %v912, %v602
    %v930 = vmul.f32 %v914, %v603
    %v931 = vmul.f32 %v900, %v915
    %v932 = vmul.f32 %v902, %v916
    %v933 = vadd.f32 %v929, %v931
    %v934 = vadd.f32 %v930, %v932
    %v935 = vtanh.pop %v933
    %v936 = vtanh.pop %v934
    %v937 = vmul.f32 %v926, %v935
    %v938 = vmul.f32 %v928, %v936
    %v939 = vpack.c.bf16 %v938, %v937
    %940 = vmatprep.subr.bf16.mxu0 %v734
    %941 = vmatpush1.bf16.msra.mxu0 %v733
    %942 = vmatprep.subr.bf16.mxu0 %v738
    %943 = vmatpush1.bf16.msra.mxu0 %v737
    %944 = vmatprep.subr.bf16.mxu0 %v742
    %945 = vmatpush1.bf16.msra.mxu0 %v741
    %946 = vmatprep.subr.bf16.mxu0 %v746
    %947 = vmatpush1.bf16.msra.mxu0 %v745
    %948 = vmatprep.subr.bf16.mxu0 %v750
    %949 = vmatpush1.bf16.msra.mxu0 %v749
    %950 = vmatprep.subr.bf16.mxu0 %v754
    %951 = vmatpush1.bf16.msra.mxu0 %v753
    %952 = vmatprep.subr.bf16.mxu0 %v758
    %953 = vmatpush1.bf16.msra.mxu0 %v757
    %954 = vmatprep.subr.bf16.mxu0 %v762
    %955 = vmatpush1.bf16.msra.mxu0 %v761
    %956 = vmatprep.subr.bf16.mxu0 0
    %957 = vmatpush1.bf16.msra.mxu0 0
    %958 = vmatprep.subr.bf16.mxu0 0
    %959 = vmatpush1.bf16.msra.mxu0 0
    %960 = vmatprep.subr.bf16.mxu0 0
    %961 = vmatpush1.bf16.msra.mxu0 0
    %962 = vmatprep.subr.bf16.mxu0 0
    %963 = vmatpush1.bf16.msra.mxu0 0
    %964 = vmatprep.subr.bf16.mxu0 0
    %965 = vmatpush1.bf16.msra.mxu0 0
    %966 = vmatprep.subr.bf16.mxu0 0
    %967 = vmatpush1.bf16.msra.mxu0 0
    %968 = vmatprep.subr.bf16.mxu0 0
    %969 = vmatpush1.bf16.msra.mxu0 0
    %970 = vmatprep.subr.bf16.mxu0 0
    %971 = vmatpush1.bf16.msra.mxu0 0
    %972 = vmatprep.mubr.bf16.mxu0 0
    %973 = vmatmul.mubr.bf16.gmra.mrb[0].mxu0 %v939
    %v974 = vpop.f32.mrb[0].mxu0
    %v975 = vadd.f32 0.0, %v974
    %v976 = vpop.f32.mrb[0].mxu0
    %v977 = vadd.f32 0.0, %v976
    %v978 = vpop.f32.mrb[0].mxu0
    %v979 = vadd.f32 0.0, %v978
    %v980 = vpop.f32.mrb[0].mxu0
    %v981 = vadd.f32 0.0, %v980
    %982 = vdwg.mxu0
    %983 = vmatprep.subr.bf16.mxu0 %v736
    %984 = vmatpush1.bf16.msra.mxu0 %v735
    %985 = vmatprep.subr.bf16.mxu0 %v740
    %986 = vmatpush1.bf16.msra.mxu0 %v739
    %987 = vmatprep.subr.bf16.mxu0 %v744
    %988 = vmatpush1.bf16.msra.mxu0 %v743
    %989 = vmatprep.subr.bf16.mxu0 %v748
    %990 = vmatpush1.bf16.msra.mxu0 %v747
    %991 = vmatprep.subr.bf16.mxu0 %v752
    %992 = vmatpush1.bf16.msra.mxu0 %v751
    %993 = vmatprep.subr.bf16.mxu0 %v756
    %994 = vmatpush1.bf16.msra.mxu0 %v755
    %995 = vmatprep.subr.bf16.mxu0 %v760
    %996 = vmatpush1.bf16.msra.mxu0 %v759
    %997 = vmatprep.subr.bf16.mxu0 %v764
    %998 = vmatpush1.bf16.msra.mxu0 %v763
    %999 = vmatprep.subr.bf16.mxu0 0
    %1000 = vmatpush1.bf16.msra.mxu0 0
    %1001 = vmatprep.subr.bf16.mxu0 0
    %1002 = vmatpush1.bf16.msra.mxu0 0
    %1003 = vmatprep.subr.bf16.mxu0 0
    %1004 = vmatpush1.bf16.msra.mxu0 0
    %1005 = vmatprep.subr.bf16.mxu0 0
    %1006 = vmatpush1.bf16.msra.mxu0 0
    %1007 = vmatprep.subr.bf16.mxu0 0
    %1008 = vmatpush1.bf16.msra.mxu0 0
    %1009 = vmatprep.subr.bf16.mxu0 0
    %1010 = vmatpush1.bf16.msra.mxu0 0
    %1011 = vmatprep.subr.bf16.mxu0 0
    %1012 = vmatpush1.bf16.msra.mxu0 0
    %1013 = vmatprep.subr.bf16.mxu0 0
    %1014 = vmatpush1.bf16.msra.mxu0 0
    %1015 = vmatprep.mubr.bf16.mxu0 0
    %1016 = vmatmul.mubr.bf16.gmra.mrb[0].mxu0 %v939
    %v1017 = vpop.f32.mrb[0].mxu0
    %v1018 = vadd.f32 0.0, %v1017
    %v1019 = vpop.f32.mrb[0].mxu0
    %v1020 = vadd.f32 0.0, %v1019
    %v1021 = vpop.f32.mrb[0].mxu0
    %v1022 = vadd.f32 0.0, %v1021
    %v1023 = vpop.f32.mrb[0].mxu0
    %v1024 = vadd.f32 0.0, %v1023
    %1025 = vdwg.mxu0
    %v1026 = vadd.f32 %v419, %v975
    %v1027 = vadd.f32 %v421, %v977
    %v1028 = vadd.f32 %v532, %v1018
    %v1029 = vadd.f32 %v534, %v1020
    %v1030 = vadd.f32 %v423, %v979
    %v1031 = vadd.f32 %v425, %v981
    %v1032 = vadd.f32 %v536, %v1022
    %v1033 = vadd.f32 %v538, %v1024
    %v1034 = vxor.u32 %v1026, 2147483648
    %v1035 = vxor.u32 %v1030, 2147483648
    %v1036 = vmul.f32 %v1034, 1.442695
    %v1037 = vpow.pop %v1036
    %v1038 = vmul.f32 %v1035, 1.442695
    %v1039 = vpow.pop %v1038
    %v1040 = vadd.f32 %v1037, 1.0
    %v1041 = vadd.f32 %v1039, 1.0
    %v1042 = vrcp.pop %v1040
    %v1043 = vmul.f32 1.0, %v1042
    %v1044 = vrcp.pop %v1041
    %v1045 = vmul.f32 1.0, %v1044
    %v1046 = vxor.u32 %v1027, 2147483648
    %v1047 = vxor.u32 %v1031, 2147483648
    %v1048 = vmul.f32 %v1046, 1.442695
    %v1049 = vpow.pop %v1048
    %v1050 = vmul.f32 %v1047, 1.442695
    %v1051 = vpow.pop %v1050
    %v1052 = vadd.f32 %v1049, 1.0
    %v1053 = vadd.f32 %v1051, 1.0
    %v1054 = vrcp.pop %v1052
    %v1055 = vmul.f32 1.0, %v1054
    %v1056 = vrcp.pop %v1053
    %v1057 = vmul.f32 1.0, %v1056
    %v1058 = vtanh.pop %v1028
    %v1059 = vtanh.pop %v1032
    %v1060 = vxor.u32 %v1029, 2147483648
    %v1061 = vxor.u32 %v1033, 2147483648
    %v1062 = vmul.f32 %v1060, 1.442695
    %v1063 = vpow.pop %v1062
    %v1064 = vmul.f32 %v1061, 1.442695
    %v1065 = vpow.pop %v1064
    %v1066 = vadd.f32 %v1063, 1.0
    %v1067 = vadd.f32 %v1065, 1.0
    %v1068 = vrcp.pop %v1066
    %v1069 = vmul.f32 1.0, %v1068
    %v1070 = vrcp.pop %v1067
    %v1071 = vmul.f32 1.0, %v1070
    %v1072 = vmul.f32 %v1055, %v933
    %v1073 = vmul.f32 %v1057, %v934
    %v1074 = vmul.f32 %v1043, %v1058
    %v1075 = vmul.f32 %v1045, %v1059
    %v1076 = vadd.f32 %v1072, %v1074
    %v1077 = vadd.f32 %v1073, %v1075
    %v1078 = vtanh.pop %v1076
    %v1079 = vtanh.pop %v1077
    %v1080 = vmul.f32 %v1069, %v1078
    %v1081 = vmul.f32 %v1071, %v1079
    %v1082 = vpack.c.bf16 %v1081, %v1080
    %1083 = vmatprep.subr.bf16.mxu0 %v734
    %1084 = vmatpush1.bf16.msra.mxu0 %v733
    %1085 = vmatprep.subr.bf16.mxu0 %v738
    %1086 = vmatpush1.bf16.msra.mxu0 %v737
    %1087 = vmatprep.subr.bf16.mxu0 %v742
    %1088 = vmatpush1.bf16.msra.mxu0 %v741
    %1089 = vmatprep.subr.bf16.mxu0 %v746
    %1090 = vmatpush1.bf16.msra.mxu0 %v745
    %1091 = vmatprep.subr.bf16.mxu0 %v750
    %1092 = vmatpush1.bf16.msra.mxu0 %v749
    %1093 = vmatprep.subr.bf16.mxu0 %v754
    %1094 = vmatpush1.bf16.msra.mxu0 %v753
    %1095 = vmatprep.subr.bf16.mxu0 %v758
    %1096 = vmatpush1.bf16.msra.mxu0 %v757
    %1097 = vmatprep.subr.bf16.mxu0 %v762
    %1098 = vmatpush1.bf16.msra.mxu0 %v761
    %1099 = vmatprep.subr.bf16.mxu0 0
    %1100 = vmatpush1.bf16.msra.mxu0 0
    %1101 = vmatprep.subr.bf16.mxu0 0
    %1102 = vmatpush1.bf16.msra.mxu0 0
    %1103 = vmatprep.subr.bf16.mxu0 0
    %1104 = vmatpush1.bf16.msra.mxu0 0
    %1105 = vmatprep.subr.bf16.mxu0 0
    %1106 = vmatpush1.bf16.msra.mxu0 0
    %1107 = vmatprep.subr.bf16.mxu0 0
    %1108 = vmatpush1.bf16.msra.mxu0 0
    %1109 = vmatprep.subr.bf16.mxu0 0
    %1110 = vmatpush1.bf16.msra.mxu0 0
    %1111 = vmatprep.subr.bf16.mxu0 0
    %1112 = vmatpush1.bf16.msra.mxu0 0
    %1113 = vmatprep.subr.bf16.mxu0 0
    %1114 = vmatpush1.bf16.msra.mxu0 0
    %1115 = vmatprep.mubr.bf16.mxu0 0
    %1116 = vmatmul.mubr.bf16.gmra.mrb[0].mxu0 %v1082
    %v1117 = vpop.f32.mrb[0].mxu0
    %v1118 = vadd.f32 0.0, %v1117
    %v1119 = vpop.f32.mrb[0].mxu0
    %v1120 = vadd.f32 0.0, %v1119
    %v1121 = vpop.f32.mrb[0].mxu0
    %v1122 = vadd.f32 0.0, %v1121
    %v1123 = vpop.f32.mrb[0].mxu0
    %v1124 = vadd.f32 0.0, %v1123
    %1125 = vdwg.mxu0
    %1126 = vmatprep.subr.bf16.mxu0 %v736
    %1127 = vmatpush1.bf16.msra.mxu0 %v735
    %1128 = vmatprep.subr.bf16.mxu0 %v740
    %1129 = vmatpush1.bf16.msra.mxu0 %v739
    %1130 = vmatprep.subr.bf16.mxu0 %v744
    %1131 = vmatpush1.bf16.msra.mxu0 %v743
    %1132 = vmatprep.subr.bf16.mxu0 %v748
    %1133 = vmatpush1.bf16.msra.mxu0 %v747
    %1134 = vmatprep.subr.bf16.mxu0 %v752
    %1135 = vmatpush1.bf16.msra.mxu0 %v751
    %1136 = vmatprep.subr.bf16.mxu0 %v756
    %1137 = vmatpush1.bf16.msra.mxu0 %v755
    %1138 = vmatprep.subr.bf16.mxu0 %v760
    %1139 = vmatpush1.bf16.msra.mxu0 %v759
    %1140 = vmatprep.subr.bf16.mxu0 %v764
    %1141 = vmatpush1.bf16.msra.mxu0 %v763
    %1142 = vmatprep.subr.bf16.mxu0 0
    %1143 = vmatpush1.bf16.msra.mxu0 0
    %1144 = vmatprep.subr.bf16.mxu0 0
    %1145 = vmatpush1.bf16.msra.mxu0 0
    %1146 = vmatprep.subr.bf16.mxu0 0
    %1147 = vmatpush1.bf16.msra.mxu0 0
    %1148 = vmatprep.subr.bf16.mxu0 0
    %1149 = vmatpush1.bf16.msra.mxu0 0
    %1150 = vmatprep.subr.bf16.mxu0 0
    %1151 = vmatpush1.bf16.msra.mxu0 0
    %1152 = vmatprep.subr.bf16.mxu0 0
    %1153 = vmatpush1.bf16.msra.mxu0 0
    %1154 = vmatprep.subr.bf16.mxu0 0
    %1155 = vmatpush1.bf16.msra.mxu0 0
    %1156 = vmatprep.subr.bf16.mxu0 0
    %1157 = vmatpush1.bf16.msra.mxu0 0
    %1158 = vmatprep.mubr.bf16.mxu0 0
    %1159 = vmatmul.mubr.bf16.gmra.mrb[0].mxu0 %v1082
    %v1160 = vpop.f32.mrb[0].mxu0
    %v1161 = vadd.f32 0.0, %v1160
    %v1162 = vpop.f32.mrb[0].mxu0
    %v1163 = vadd.f32 0.0, %v1162
    %v1164 = vpop.f32.mrb[0].mxu0
    %v1165 = vadd.f32 0.0, %v1164
    %v1166 = vpop.f32.mrb[0].mxu0
    %v1167 = vadd.f32 0.0, %v1166
    %1168 = vdwg.mxu0
    %v1169 = vadd.f32 %v429, %v1118
    %v1170 = vadd.f32 %v431, %v1120
    %v1171 = vadd.f32 %v542, %v1161
    %v1172 = vadd.f32 %v544, %v1163
    %v1173 = vadd.f32 %v433, %v1122
    %v1174 = vadd.f32 %v435, %v1124
    %v1175 = vadd.f32 %v546, %v1165
    %v1176 = vadd.f32 %v548, %v1167
    %v1177 = vxor.u32 %v1169, 2147483648
    %v1178 = vxor.u32 %v1173, 2147483648
    %v1179 = vmul.f32 %v1177, 1.442695
    %v1180 = vpow.pop %v1179
    %v1181 = vmul.f32 %v1178, 1.442695
    %v1182 = vpow.pop %v1181
    %v1183 = vadd.f32 %v1180, 1.0
    %v1184 = vadd.f32 %v1182, 1.0
    %v1185 = vrcp.pop %v1183
    %v1186 = vmul.f32 1.0, %v1185
    %v1187 = vrcp.pop %v1184
    %v1188 = vmul.f32 1.0, %v1187
    %v1189 = vxor.u32 %v1170, 2147483648
    %v1190 = vxor.u32 %v1174, 2147483648
    %v1191 = vmul.f32 %v1189, 1.442695
    %v1192 = vpow.pop %v1191
    %v1193 = vmul.f32 %v1190, 1.442695
    %v1194 = vpow.pop %v1193
    %v1195 = vadd.f32 %v1192, 1.0
    %v1196 = vadd.f32 %v1194, 1.0
    %v1197 = vrcp.pop %v1195
    %v1198 = vmul.f32 1.0, %v1197
    %v1199 = vrcp.pop %v1196
    %v1200 = vmul.f32 1.0, %v1199
    %v1201 = vtanh.pop %v1171
    %v1202 = vtanh.pop %v1175
    %v1203 = vxor.u32 %v1172, 2147483648
    %v1204 = vxor.u32 %v1176, 2147483648
    %v1205 = vmul.f32 %v1203, 1.442695
    %v1206 = vpow.pop %v1205
    %v1207 = vmul.f32 %v1204, 1.442695
    %v1208 = vpow.pop %v1207
    %v1209 = vadd.f32 %v1206, 1.0
    %v1210 = vadd.f32 %v1208, 1.0
    %v1211 = vrcp.pop %v1209
    %v1212 = vmul.f32 1.0, %v1211
    %v1213 = vrcp.pop %v1210
    %v1214 = vmul.f32 1.0, %v1213
    %v1215 = vmul.f32 %v1198, %v1076
    %v1216 = vmul.f32 %v1200, %v1077
    %v1217 = vmul.f32 %v1186, %v1201
    %v1218 = vmul.f32 %v1188, %v1202
    %v1219 = vadd.f32 %v1215, %v1217
    %v1220 = vadd.f32 %v1216, %v1218
    %v1221 = vtanh.pop %v1219
    %v1222 = vtanh.pop %v1220
    %v1223 = vmul.f32 %v1212, %v1221
    %v1224 = vmul.f32 %v1214, %v1222
    %v1225 = vpack.c.bf16 %v1224, %v1223
    %1226 = vmatprep.subr.bf16.mxu0 %v734
    %1227 = vmatpush1.bf16.msra.mxu0 %v733
    %1228 = vmatprep.subr.bf16.mxu0 %v738
    %1229 = vmatpush1.bf16.msra.mxu0 %v737
    %1230 = vmatprep.subr.bf16.mxu0 %v742
    %1231 = vmatpush1.bf16.msra.mxu0 %v741
    %1232 = vmatprep.subr.bf16.mxu0 %v746
    %1233 = vmatpush1.bf16.msra.mxu0 %v745
    %1234 = vmatprep.subr.bf16.mxu0 %v750
    %1235 = vmatpush1.bf16.msra.mxu0 %v749
    %1236 = vmatprep.subr.bf16.mxu0 %v754
    %1237 = vmatpush1.bf16.msra.mxu0 %v753
    %1238 = vmatprep.subr.bf16.mxu0 %v758
    %1239 = vmatpush1.bf16.msra.mxu0 %v757
    %1240 = vmatprep.subr.bf16.mxu0 %v762
    %1241 = vmatpush1.bf16.msra.mxu0 %v761
    %1242 = vmatprep.subr.bf16.mxu0 0
    %1243 = vmatpush1.bf16.msra.mxu0 0
    %1244 = vmatprep.subr.bf16.mxu0 0
    %1245 = vmatpush1.bf16.msra.mxu0 0
    %1246 = vmatprep.subr.bf16.mxu0 0
    %1247 = vmatpush1.bf16.msra.mxu0 0
    %1248 = vmatprep.subr.bf16.mxu0 0
    %1249 = vmatpush1.bf16.msra.mxu0 0
    %1250 = vmatprep.subr.bf16.mxu0 0
    %1251 = vmatpush1.bf16.msra.mxu0 0
    %1252 = vmatprep.subr.bf16.mxu0 0
    %1253 = vmatpush1.bf16.msra.mxu0 0
    %1254 = vmatprep.subr.bf16.mxu0 0
    %1255 = vmatpush1.bf16.msra.mxu0 0
    %1256 = vmatprep.subr.bf16.mxu0 0
    %1257 = vmatpush1.bf16.msra.mxu0 0
    %1258 = vmatprep.mubr.bf16.mxu0 0
    %1259 = vmatmul.mubr.bf16.gmra.mrb[0].mxu0 %v1225
    %v1260 = vpop.f32.mrb[0].mxu0
    %v1261 = vadd.f32 0.0, %v1260
    %v1262 = vpop.f32.mrb[0].mxu0
    %v1263 = vadd.f32 0.0, %v1262
    %v1264 = vpop.f32.mrb[0].mxu0
    %v1265 = vadd.f32 0.0, %v1264
    %v1266 = vpop.f32.mrb[0].mxu0
    %v1267 = vadd.f32 0.0, %v1266
    %1268 = vdwg.mxu0
    %1269 = vmatprep.subr.bf16.mxu0 %v736
    %1270 = vmatpush1.bf16.msra.mxu0 %v735
    %1271 = vmatprep.subr.bf16.mxu0 %v740
    %1272 = vmatpush1.bf16.msra.mxu0 %v739
    %1273 = vmatprep.subr.bf16.mxu0 %v744
    %1274 = vmatpush1.bf16.msra.mxu0 %v743
    %1275 = vmatprep.subr.bf16.mxu0 %v748
    %1276 = vmatpush1.bf16.msra.mxu0 %v747
    %1277 = vmatprep.subr.bf16.mxu0 %v752
    %1278 = vmatpush1.bf16.msra.mxu0 %v751
    %1279 = vmatprep.subr.bf16.mxu0 %v756
    %1280 = vmatpush1.bf16.msra.mxu0 %v755
    %1281 = vmatprep.subr.bf16.mxu0 %v760
    %1282 = vmatpush1.bf16.msra.mxu0 %v759
    %1283 = vmatprep.subr.bf16.mxu0 %v764
    %1284 = vmatpush1.bf16.msra.mxu0 %v763
    %1285 = vmatprep.subr.bf16.mxu0 0
    %1286 = vmatpush1.bf16.msra.mxu0 0
    %1287 = vmatprep.subr.bf16.mxu0 0
    %1288 = vmatpush1.bf16.msra.mxu0 0
    %1289 = vmatprep.subr.bf16.mxu0 0
    %1290 = vmatpush1.bf16.msra.mxu0 0
    %1291 = vmatprep.subr.bf16.mxu0 0
    %1292 = vmatpush1.bf16.msra.mxu0 0
    %1293 = vmatprep.subr.bf16.mxu0 0
    %1294 = vmatpush1.bf16.msra.mxu0 0
    %1295 = vmatprep.subr.bf16.mxu0 0
    %1296 = vmatpush1.bf16.msra.mxu0 0
    %1297 = vmatprep.subr.bf16.mxu0 0
    %1298 = vmatpush1.bf16.msra.mxu0 0
    %1299 = vmatprep.subr.bf16.mxu0 0
    %1300 = vmatpush1.bf16.msra.mxu0 0
    %1301 = vmatprep.mubr.bf16.mxu0 0
    %1302 = vmatmul.mubr.bf16.gmra.mrb[0].mxu0 %v1225
    %v1303 = vpop.f32.mrb[0].mxu0
    %v1304 = vadd.f32 0.0, %v1303
    %v1305 = vpop.f32.mrb[0].mxu0
    %v1306 = vadd.f32 0.0, %v1305
    %v1307 = vpop.f32.mrb[0].mxu0
    %v1308 = vadd.f32 0.0, %v1307
    %v1309 = vpop.f32.mrb[0].mxu0
    %v1310 = vadd.f32 0.0, %v1309
    %1311 = vdwg.mxu0
    %v1312 = vadd.f32 %v439, %v1261
    %v1313 = vadd.f32 %v441, %v1263
    %v1314 = vadd.f32 %v552, %v1304
    %v1315 = vadd.f32 %v554, %v1306
    %v1316 = vadd.f32 %v443, %v1265
    %v1317 = vadd.f32 %v445, %v1267
    %v1318 = vadd.f32 %v556, %v1308
    %v1319 = vadd.f32 %v558, %v1310
    %v1320 = vxor.u32 %v1312, 2147483648
    %v1321 = vxor.u32 %v1316, 2147483648
    %v1322 = vmul.f32 %v1320, 1.442695
    %v1323 = vpow.pop %v1322
    %v1324 = vmul.f32 %v1321, 1.442695
    %v1325 = vpow.pop %v1324
    %v1326 = vadd.f32 %v1323, 1.0
    %v1327 = vadd.f32 %v1325, 1.0
    %v1328 = vrcp.pop %v1326
    %v1329 = vmul.f32 1.0, %v1328
    %v1330 = vrcp.pop %v1327
    %v1331 = vmul.f32 1.0, %v1330
    %v1332 = vxor.u32 %v1313, 2147483648
    %v1333 = vxor.u32 %v1317, 2147483648
    %v1334 = vmul.f32 %v1332, 1.442695
    %v1335 = vpow.pop %v1334
    %v1336 = vmul.f32 %v1333, 1.442695
    %v1337 = vpow.pop %v1336
    %v1338 = vadd.f32 %v1335, 1.0
    %v1339 = vadd.f32 %v1337, 1.0
    %v1340 = vrcp.pop %v1338
    %v1341 = vmul.f32 1.0, %v1340
    %v1342 = vrcp.pop %v1339
    %v1343 = vmul.f32 1.0, %v1342
    %v1344 = vtanh.pop %v1314
    %v1345 = vtanh.pop %v1318
    %v1346 = vxor.u32 %v1315, 2147483648
    %v1347 = vxor.u32 %v1319, 2147483648
    %v1348 = vmul.f32 %v1346, 1.442695
    %v1349 = vpow.pop %v1348
    %v1350 = vmul.f32 %v1347, 1.442695
    %v1351 = vpow.pop %v1350
    %v1352 = vadd.f32 %v1349, 1.0
    %v1353 = vadd.f32 %v1351, 1.0
    %v1354 = vrcp.pop %v1352
    %v1355 = vmul.f32 1.0, %v1354
    %v1356 = vrcp.pop %v1353
    %v1357 = vmul.f32 1.0, %v1356
    %v1358 = vmul.f32 %v1341, %v1219
    %v1359 = vmul.f32 %v1343, %v1220
    %v1360 = vmul.f32 %v1329, %v1344
    %v1361 = vmul.f32 %v1331, %v1345
    %v1362 = vadd.f32 %v1358, %v1360
    %v1363 = vadd.f32 %v1359, %v1361
    %v1364 = vtanh.pop %v1362
    %v1365 = vtanh.pop %v1363
    %v1366 = vmul.f32 %v1355, %v1364
    %v1367 = vmul.f32 %v1357, %v1365
    %v1368 = vpack.c.bf16 %v1367, %v1366
    %1369 = vmatprep.subr.bf16.mxu0 %v734
    %1370 = vmatpush1.bf16.msra.mxu0 %v733
    %1371 = vmatprep.subr.bf16.mxu0 %v738
    %1372 = vmatpush1.bf16.msra.mxu0 %v737
    %1373 = vmatprep.subr.bf16.mxu0 %v742
    %1374 = vmatpush1.bf16.msra.mxu0 %v741
    %1375 = vmatprep.subr.bf16.mxu0 %v746
    %1376 = vmatpush1.bf16.msra.mxu0 %v745
    %1377 = vmatprep.subr.bf16.mxu0 %v750
    %1378 = vmatpush1.bf16.msra.mxu0 %v749
    %1379 = vmatprep.subr.bf16.mxu0 %v754
    %1380 = vmatpush1.bf16.msra.mxu0 %v753
    %1381 = vmatprep.subr.bf16.mxu0 %v758
    %1382 = vmatpush1.bf16.msra.mxu0 %v757
    %1383 = vmatprep.subr.bf16.mxu0 %v762
    %1384 = vmatpush1.bf16.msra.mxu0 %v761
    %1385 = vmatprep.subr.bf16.mxu0 0
    %1386 = vmatpush1.bf16.msra.mxu0 0
    %1387 = vmatprep.subr.bf16.mxu0 0
    %1388 = vmatpush1.bf16.msra.mxu0 0
    %1389 = vmatprep.subr.bf16.mxu0 0
    %1390 = vmatpush1.bf16.msra.mxu0 0
    %1391 = vmatprep.subr.bf16.mxu0 0
    %1392 = vmatpush1.bf16.msra.mxu0 0
    %1393 = vmatprep.subr.bf16.mxu0 0
    %1394 = vmatpush1.bf16.msra.mxu0 0
    %1395 = vmatprep.subr.bf16.mxu0 0
    %1396 = vmatpush1.bf16.msra.mxu0 0
    %1397 = vmatprep.subr.bf16.mxu0 0
    %1398 = vmatpush1.bf16.msra.mxu0 0
    %1399 = vmatprep.subr.bf16.mxu0 0
    %1400 = vmatpush1.bf16.msra.mxu0 0
    %1401 = vmatprep.mubr.bf16.mxu0 0
    %1402 = vmatmul.mubr.bf16.gmra.mrb[0].mxu0 %v1368
    %v1403 = vpop.f32.mrb[0].mxu0
    %v1404 = vadd.f32 0.0, %v1403
    %v1405 = vpop.f32.mrb[0].mxu0
    %v1406 = vadd.f32 0.0, %v1405
    %v1407 = vpop.f32.mrb[0].mxu0
    %v1408 = vadd.f32 0.0, %v1407
    %v1409 = vpop.f32.mrb[0].mxu0
    %v1410 = vadd.f32 0.0, %v1409
    %1411 = vdwg.mxu0
    %1412 = vmatprep.subr.bf16.mxu0 %v736
    %1413 = vmatpush1.bf16.msra.mxu0 %v735
    %1414 = vmatprep.subr.bf16.mxu0 %v740
    %1415 = vmatpush1.bf16.msra.mxu0 %v739
    %1416 = vmatprep.subr.bf16.mxu0 %v744
    %1417 = vmatpush1.bf16.msra.mxu0 %v743
    %1418 = vmatprep.subr.bf16.mxu0 %v748
    %1419 = vmatpush1.bf16.msra.mxu0 %v747
    %1420 = vmatprep.subr.bf16.mxu0 %v752
    %1421 = vmatpush1.bf16.msra.mxu0 %v751
    %1422 = vmatprep.subr.bf16.mxu0 %v756
    %1423 = vmatpush1.bf16.msra.mxu0 %v755
    %1424 = vmatprep.subr.bf16.mxu0 %v760
    %1425 = vmatpush1.bf16.msra.mxu0 %v759
    %1426 = vmatprep.subr.bf16.mxu0 %v764
    %1427 = vmatpush1.bf16.msra.mxu0 %v763
    %1428 = vmatprep.subr.bf16.mxu0 0
    %1429 = vmatpush1.bf16.msra.mxu0 0
    %1430 = vmatprep.subr.bf16.mxu0 0
    %1431 = vmatpush1.bf16.msra.mxu0 0
    %1432 = vmatprep.subr.bf16.mxu0 0
    %1433 = vmatpush1.bf16.msra.mxu0 0
    %1434 = vmatprep.subr.bf16.mxu0 0
    %1435 = vmatpush1.bf16.msra.mxu0 0
    %1436 = vmatprep.subr.bf16.mxu0 0
    %1437 = vmatpush1.bf16.msra.mxu0 0
    %1438 = vmatprep.subr.bf16.mxu0 0
    %1439 = vmatpush1.bf16.msra.mxu0 0
    %1440 = vmatprep.subr.bf16.mxu0 0
    %1441 = vmatpush1.bf16.msra.mxu0 0
    %1442 = vmatprep.subr.bf16.mxu0 0
    %1443 = vmatpush1.bf16.msra.mxu0 0
    %1444 = vmatprep.mubr.bf16.mxu0 0
    %1445 = vmatmul.mubr.bf16.gmra.mrb[0].mxu0 %v1368
    %v1446 = vpop.f32.mrb[0].mxu0
    %v1447 = vadd.f32 0.0, %v1446
    %v1448 = vpop.f32.mrb[0].mxu0
    %v1449 = vadd.f32 0.0, %v1448
    %v1450 = vpop.f32.mrb[0].mxu0
    %v1451 = vadd.f32 0.0, %v1450
    %v1452 = vpop.f32.mrb[0].mxu0
    %v1453 = vadd.f32 0.0, %v1452
    %1454 = vdwg.mxu0
    %v1455 = vadd.f32 %v449, %v1404
    %v1456 = vadd.f32 %v451, %v1406
    %v1457 = vadd.f32 %v562, %v1447
    %v1458 = vadd.f32 %v564, %v1449
    %v1459 = vadd.f32 %v453, %v1408
    %v1460 = vadd.f32 %v455, %v1410
    %v1461 = vadd.f32 %v566, %v1451
    %v1462 = vadd.f32 %v568, %v1453
    %v1463 = vxor.u32 %v1455, 2147483648
    %v1464 = vxor.u32 %v1459, 2147483648
    %v1465 = vmul.f32 %v1463, 1.442695
    %v1466 = vpow.pop %v1465
    %v1467 = vmul.f32 %v1464, 1.442695
    %v1468 = vpow.pop %v1467
    %v1469 = vadd.f32 %v1466, 1.0
    %v1470 = vadd.f32 %v1468, 1.0
    %v1471 = vrcp.pop %v1469
    %v1472 = vmul.f32 1.0, %v1471
    %v1473 = vrcp.pop %v1470
    %v1474 = vmul.f32 1.0, %v1473
    %v1475 = vxor.u32 %v1456, 2147483648
    %v1476 = vxor.u32 %v1460, 2147483648
    %v1477 = vmul.f32 %v1475, 1.442695
    %v1478 = vpow.pop %v1477
    %v1479 = vmul.f32 %v1476, 1.442695
    %v1480 = vpow.pop %v1479
    %v1481 = vadd.f32 %v1478, 1.0
    %v1482 = vadd.f32 %v1480, 1.0
    %v1483 = vrcp.pop %v1481
    %v1484 = vmul.f32 1.0, %v1483
    %v1485 = vrcp.pop %v1482
    %v1486 = vmul.f32 1.0, %v1485
    %v1487 = vtanh.pop %v1457
    %v1488 = vtanh.pop %v1461
    %v1489 = vxor.u32 %v1458, 2147483648
    %v1490 = vxor.u32 %v1462, 2147483648
    %v1491 = vmul.f32 %v1489, 1.442695
    %v1492 = vpow.pop %v1491
    %v1493 = vmul.f32 %v1490, 1.442695
    %v1494 = vpow.pop %v1493
    %v1495 = vadd.f32 %v1492, 1.0
    %v1496 = vadd.f32 %v1494, 1.0
    %v1497 = vrcp.pop %v1495
    %v1498 = vmul.f32 1.0, %v1497
    %v1499 = vrcp.pop %v1496
    %v1500 = vmul.f32 1.0, %v1499
    %v1501 = vmul.f32 %v1484, %v1362
    %v1502 = vmul.f32 %v1486, %v1363
    %v1503 = vmul.f32 %v1472, %v1487
    %v1504 = vmul.f32 %v1474, %v1488
    %v1505 = vadd.f32 %v1501, %v1503
    %v1506 = vadd.f32 %v1502, %v1504
    %v1507 = vtanh.pop %v1505
    %v1508 = vtanh.pop %v1506
    %v1509 = vmul.f32 %v1498, %v1507
    %v1510 = vmul.f32 %v1500, %v1508
    %v1511 = vpack.c.bf16 %v1510, %v1509
    %1512 = vmatprep.subr.bf16.mxu0 %v734
    %1513 = vmatpush1.bf16.msra.mxu0 %v733
    %1514 = vmatprep.subr.bf16.mxu0 %v738
    %1515 = vmatpush1.bf16.msra.mxu0 %v737
    %1516 = vmatprep.subr.bf16.mxu0 %v742
    %1517 = vmatpush1.bf16.msra.mxu0 %v741
    %1518 = vmatprep.subr.bf16.mxu0 %v746
    %1519 = vmatpush1.bf16.msra.mxu0 %v745
    %1520 = vmatprep.subr.bf16.mxu0 %v750
    %1521 = vmatpush1.bf16.msra.mxu0 %v749
    %1522 = vmatprep.subr.bf16.mxu0 %v754
    %1523 = vmatpush1.bf16.msra.mxu0 %v753
    %1524 = vmatprep.subr.bf16.mxu0 %v758
    %1525 = vmatpush1.bf16.msra.mxu0 %v757
    %1526 = vmatprep.subr.bf16.mxu0 %v762
    %1527 = vmatpush1.bf16.msra.mxu0 %v761
    %1528 = vmatprep.subr.bf16.mxu0 0
    %1529 = vmatpush1.bf16.msra.mxu0 0
    %1530 = vmatprep.subr.bf16.mxu0 0
    %1531 = vmatpush1.bf16.msra.mxu0 0
    %1532 = vmatprep.subr.bf16.mxu0 0
    %1533 = vmatpush1.bf16.msra.mxu0 0
    %1534 = vmatprep.subr.bf16.mxu0 0
    %1535 = vmatpush1.bf16.msra.mxu0 0
    %1536 = vmatprep.subr.bf16.mxu0 0
    %1537 = vmatpush1.bf16.msra.mxu0 0
    %1538 = vmatprep.subr.bf16.mxu0 0
    %1539 = vmatpush1.bf16.msra.mxu0 0
    %1540 = vmatprep.subr.bf16.mxu0 0
    %1541 = vmatpush1.bf16.msra.mxu0 0
    %1542 = vmatprep.subr.bf16.mxu0 0
    %1543 = vmatpush1.bf16.msra.mxu0 0
    %1544 = vmatprep.mubr.bf16.mxu0 0
    %1545 = vmatmul.mubr.bf16.gmra.mrb[0].mxu0 %v1511
    %v1546 = vpop.f32.mrb[0].mxu0
    %v1547 = vadd.f32 0.0, %v1546
    %v1548 = vpop.f32.mrb[0].mxu0
    %v1549 = vadd.f32 0.0, %v1548
    %v1550 = vpop.f32.mrb[0].mxu0
    %v1551 = vadd.f32 0.0, %v1550
    %v1552 = vpop.f32.mrb[0].mxu0
    %v1553 = vadd.f32 0.0, %v1552
    %1554 = vdwg.mxu0
    %1555 = vmatprep.subr.bf16.mxu0 %v736
    %1556 = vmatpush1.bf16.msra.mxu0 %v735
    %1557 = vmatprep.subr.bf16.mxu0 %v740
    %1558 = vmatpush1.bf16.msra.mxu0 %v739
    %1559 = vmatprep.subr.bf16.mxu0 %v744
    %1560 = vmatpush1.bf16.msra.mxu0 %v743
    %1561 = vmatprep.subr.bf16.mxu0 %v748
    %1562 = vmatpush1.bf16.msra.mxu0 %v747
    %1563 = vmatprep.subr.bf16.mxu0 %v752
    %1564 = vmatpush1.bf16.msra.mxu0 %v751
    %1565 = vmatprep.subr.bf16.mxu0 %v756
    %1566 = vmatpush1.bf16.msra.mxu0 %v755
    %1567 = vmatprep.subr.bf16.mxu0 %v760
    %1568 = vmatpush1.bf16.msra.mxu0 %v759
    %1569 = vmatprep.subr.bf16.mxu0 %v764
    %1570 = vmatpush1.bf16.msra.mxu0 %v763
    %1571 = vmatprep.subr.bf16.mxu0 0
    %1572 = vmatpush1.bf16.msra.mxu0 0
    %1573 = vmatprep.subr.bf16.mxu0 0
    %1574 = vmatpush1.bf16.msra.mxu0 0
    %1575 = vmatprep.subr.bf16.mxu0 0
    %1576 = vmatpush1.bf16.msra.mxu0 0
    %1577 = vmatprep.subr.bf16.mxu0 0
    %1578 = vmatpush1.bf16.msra.mxu0 0
    %1579 = vmatprep.subr.bf16.mxu0 0
    %1580 = vmatpush1.bf16.msra.mxu0 0
    %1581 = vmatprep.subr.bf16.mxu0 0
    %1582 = vmatpush1.bf16.msra.mxu0 0
    %1583 = vmatprep.subr.bf16.mxu0 0
    %1584 = vmatpush1.bf16.msra.mxu0 0
    %1585 = vmatprep.subr.bf16.mxu0 0
    %1586 = vmatpush1.bf16.msra.mxu0 0
    %1587 = vmatprep.mubr.bf16.mxu0 0
    %1588 = vmatmul.mubr.bf16.gmra.mrb[0].mxu0 %v1511
    %v1589 = vpop.f32.mrb[0].mxu0
    %v1590 = vadd.f32 0.0, %v1589
    %v1591 = vpop.f32.mrb[0].mxu0
    %v1592 = vadd.f32 0.0, %v1591
    %v1593 = vpop.f32.mrb[0].mxu0
    %v1594 = vadd.f32 0.0, %v1593
    %v1595 = vpop.f32.mrb[0].mxu0
    %v1596 = vadd.f32 0.0, %v1595
    %1597 = vdwg.mxu0
    %v1598 = vadd.f32 %v459, %v1547
    %v1599 = vadd.f32 %v461, %v1549
    %v1600 = vadd.f32 %v572, %v1590
    %v1601 = vadd.f32 %v574, %v1592
    %v1602 = vadd.f32 %v463, %v1551
    %v1603 = vadd.f32 %v465, %v1553
    %v1604 = vadd.f32 %v576, %v1594
    %v1605 = vadd.f32 %v578, %v1596
    %v1606 = vxor.u32 %v1598, 2147483648
    %v1607 = vxor.u32 %v1602, 2147483648
    %v1608 = vmul.f32 %v1606, 1.442695
    %v1609 = vpow.pop %v1608
    %v1610 = vmul.f32 %v1607, 1.442695
    %v1611 = vpow.pop %v1610
    %v1612 = vadd.f32 %v1609, 1.0
    %v1613 = vadd.f32 %v1611, 1.0
    %v1614 = vrcp.pop %v1612
    %v1615 = vmul.f32 1.0, %v1614
    %v1616 = vrcp.pop %v1613
    %v1617 = vmul.f32 1.0, %v1616
    %v1618 = vxor.u32 %v1599, 2147483648
    %v1619 = vxor.u32 %v1603, 2147483648
    %v1620 = vmul.f32 %v1618, 1.442695
    %v1621 = vpow.pop %v1620
    %v1622 = vmul.f32 %v1619, 1.442695
    %v1623 = vpow.pop %v1622
    %v1624 = vadd.f32 %v1621, 1.0
    %v1625 = vadd.f32 %v1623, 1.0
    %v1626 = vrcp.pop %v1624
    %v1627 = vmul.f32 1.0, %v1626
    %v1628 = vrcp.pop %v1625
    %v1629 = vmul.f32 1.0, %v1628
    %v1630 = vtanh.pop %v1600
    %v1631 = vtanh.pop %v1604
    %v1632 = vxor.u32 %v1601, 2147483648
    %v1633 = vxor.u32 %v1605, 2147483648
    %v1634 = vmul.f32 %v1632, 1.442695
    %v1635 = vpow.pop %v1634
    %v1636 = vmul.f32 %v1633, 1.442695
    %v1637 = vpow.pop %v1636
    %v1638 = vadd.f32 %v1635, 1.0
    %v1639 = vadd.f32 %v1637, 1.0
    %v1640 = vrcp.pop %v1638
    %v1641 = vmul.f32 1.0, %v1640
    %v1642 = vrcp.pop %v1639
    %v1643 = vmul.f32 1.0, %v1642
    %v1644 = vmul.f32 %v1627, %v1505
    %v1645 = vmul.f32 %v1629, %v1506
    %v1646 = vmul.f32 %v1615, %v1630
    %v1647 = vmul.f32 %v1617, %v1631
    %v1648 = vadd.f32 %v1644, %v1646
    %v1649 = vadd.f32 %v1645, %v1647
    %v1650 = vtanh.pop %v1648
    %v1651 = vtanh.pop %v1649
    %v1652 = vmul.f32 %v1641, %v1650
    %v1653 = vmul.f32 %v1643, %v1651
    %v1654 = vpack.c.bf16 %v1653, %v1652
    %1655 = vmatprep.subr.bf16.mxu0 %v734
    %1656 = vmatpush1.bf16.msra.mxu0 %v733
    %1657 = vmatprep.subr.bf16.mxu0 %v738
    %1658 = vmatpush1.bf16.msra.mxu0 %v737
    %1659 = vmatprep.subr.bf16.mxu0 %v742
    %1660 = vmatpush1.bf16.msra.mxu0 %v741
    %1661 = vmatprep.subr.bf16.mxu0 %v746
    %1662 = vmatpush1.bf16.msra.mxu0 %v745
    %1663 = vmatprep.subr.bf16.mxu0 %v750
    %1664 = vmatpush1.bf16.msra.mxu0 %v749
    %1665 = vmatprep.subr.bf16.mxu0 %v754
    %1666 = vmatpush1.bf16.msra.mxu0 %v753
    %1667 = vmatprep.subr.bf16.mxu0 %v758
    %1668 = vmatpush1.bf16.msra.mxu0 %v757
    %1669 = vmatprep.subr.bf16.mxu0 %v762
    %1670 = vmatpush1.bf16.msra.mxu0 %v761
    %1671 = vmatprep.subr.bf16.mxu0 0
    %1672 = vmatpush1.bf16.msra.mxu0 0
    %1673 = vmatprep.subr.bf16.mxu0 0
    %1674 = vmatpush1.bf16.msra.mxu0 0
    %1675 = vmatprep.subr.bf16.mxu0 0
    %1676 = vmatpush1.bf16.msra.mxu0 0
    %1677 = vmatprep.subr.bf16.mxu0 0
    %1678 = vmatpush1.bf16.msra.mxu0 0
    %1679 = vmatprep.subr.bf16.mxu0 0
    %1680 = vmatpush1.bf16.msra.mxu0 0
    %1681 = vmatprep.subr.bf16.mxu0 0
    %1682 = vmatpush1.bf16.msra.mxu0 0
    %1683 = vmatprep.subr.bf16.mxu0 0
    %1684 = vmatpush1.bf16.msra.mxu0 0
    %1685 = vmatprep.subr.bf16.mxu0 0
    %1686 = vmatpush1.bf16.msra.mxu0 0
    %1687 = vmatprep.mubr.bf16.mxu0 0
    %1688 = vmatmul.mubr.bf16.gmra.mrb[0].mxu0 %v1654
    %v1689 = vpop.f32.mrb[0].mxu0
    %v1690 = vadd.f32 0.0, %v1689
    %v1691 = vpop.f32.mrb[0].mxu0
    %v1692 = vadd.f32 0.0, %v1691
    %v1693 = vpop.f32.mrb[0].mxu0
    %v1694 = vadd.f32 0.0, %v1693
    %v1695 = vpop.f32.mrb[0].mxu0
    %v1696 = vadd.f32 0.0, %v1695
    %1697 = vdwg.mxu0
    %1698 = vmatprep.subr.bf16.mxu0 %v736
    %1699 = vmatpush1.bf16.msra.mxu0 %v735
    %1700 = vmatprep.subr.bf16.mxu0 %v740
    %1701 = vmatpush1.bf16.msra.mxu0 %v739
    %1702 = vmatprep.subr.bf16.mxu0 %v744
    %1703 = vmatpush1.bf16.msra.mxu0 %v743
    %1704 = vmatprep.subr.bf16.mxu0 %v748
    %1705 = vmatpush1.bf16.msra.mxu0 %v747
    %1706 = vmatprep.subr.bf16.mxu0 %v752
    %1707 = vmatpush1.bf16.msra.mxu0 %v751
    %1708 = vmatprep.subr.bf16.mxu0 %v756
    %1709 = vmatpush1.bf16.msra.mxu0 %v755
    %1710 = vmatprep.subr.bf16.mxu0 %v760
    %1711 = vmatpush1.bf16.msra.mxu0 %v759
    %1712 = vmatprep.subr.bf16.mxu0 %v764
    %1713 = vmatpush1.bf16.msra.mxu0 %v763
    %1714 = vmatprep.subr.bf16.mxu0 0
    %1715 = vmatpush1.bf16.msra.mxu0 0
    %1716 = vmatprep.subr.bf16.mxu0 0
    %1717 = vmatpush1.bf16.msra.mxu0 0
    %1718 = vmatprep.subr.bf16.mxu0 0
    %1719 = vmatpush1.bf16.msra.mxu0 0
    %1720 = vmatprep.subr.bf16.mxu0 0
    %1721 = vmatpush1.bf16.msra.mxu0 0
    %1722 = vmatprep.subr.bf16.mxu0 0
    %1723 = vmatpush1.bf16.msra.mxu0 0
    %1724 = vmatprep.subr.bf16.mxu0 0
    %1725 = vmatpush1.bf16.msra.mxu0 0
    %1726 = vmatprep.subr.bf16.mxu0 0
    %1727 = vmatpush1.bf16.msra.mxu0 0
    %1728 = vmatprep.subr.bf16.mxu0 0
    %1729 = vmatpush1.bf16.msra.mxu0 0
    %1730 = vmatprep.mubr.bf16.mxu0 0
    %1731 = vmatmul.mubr.bf16.gmra.mrb[0].mxu0 %v1654
    %v1732 = vpop.f32.mrb[0].mxu0
    %v1733 = vadd.f32 0.0, %v1732
    %v1734 = vpop.f32.mrb[0].mxu0
    %v1735 = vadd.f32 0.0, %v1734
    %v1736 = vpop.f32.mrb[0].mxu0
    %v1737 = vadd.f32 0.0, %v1736
    %v1738 = vpop.f32.mrb[0].mxu0
    %v1739 = vadd.f32 0.0, %v1738
    %1740 = vdwg.mxu0
    %v1741 = vadd.f32 %v469, %v1690
    %v1742 = vadd.f32 %v471, %v1692
    %v1743 = vadd.f32 %v582, %v1733
    %v1744 = vadd.f32 %v584, %v1735
    %v1745 = vadd.f32 %v473, %v1694
    %v1746 = vadd.f32 %v475, %v1696
    %v1747 = vadd.f32 %v586, %v1737
    %v1748 = vadd.f32 %v588, %v1739
    %v1749 = vxor.u32 %v1741, 2147483648
    %v1750 = vxor.u32 %v1745, 2147483648
    %v1751 = vmul.f32 %v1749, 1.442695
    %v1752 = vpow.pop %v1751
    %v1753 = vmul.f32 %v1750, 1.442695
    %v1754 = vpow.pop %v1753
    %v1755 = vadd.f32 %v1752, 1.0
    %v1756 = vadd.f32 %v1754, 1.0
    %v1757 = vrcp.pop %v1755
    %v1758 = vmul.f32 1.0, %v1757
    %v1759 = vrcp.pop %v1756
    %v1760 = vmul.f32 1.0, %v1759
    %v1761 = vxor.u32 %v1742, 2147483648
    %v1762 = vxor.u32 %v1746, 2147483648
    %v1763 = vmul.f32 %v1761, 1.442695
    %v1764 = vpow.pop %v1763
    %v1765 = vmul.f32 %v1762, 1.442695
    %v1766 = vpow.pop %v1765
    %v1767 = vadd.f32 %v1764, 1.0
    %v1768 = vadd.f32 %v1766, 1.0
    %v1769 = vrcp.pop %v1767
    %v1770 = vmul.f32 1.0, %v1769
    %v1771 = vrcp.pop %v1768
    %v1772 = vmul.f32 1.0, %v1771
    %v1773 = vtanh.pop %v1743
    %v1774 = vtanh.pop %v1747
    %v1775 = vxor.u32 %v1744, 2147483648
    %v1776 = vxor.u32 %v1748, 2147483648
    %v1777 = vmul.f32 %v1775, 1.442695
    %v1778 = vpow.pop %v1777
    %v1779 = vmul.f32 %v1776, 1.442695
    %v1780 = vpow.pop %v1779
    %v1781 = vadd.f32 %v1778, 1.0
    %v1782 = vadd.f32 %v1780, 1.0
    %v1783 = vrcp.pop %v1781
    %v1784 = vmul.f32 1.0, %v1783
    %v1785 = vrcp.pop %v1782
    %v1786 = vmul.f32 1.0, %v1785
    %v1787 = vmul.f32 %v1770, %v1648
    %v1788 = vmul.f32 %v1772, %v1649
    %v1789 = vmul.f32 %v1758, %v1773
    %v1790 = vmul.f32 %v1760, %v1774
    %v1791 = vadd.f32 %v1787, %v1789
    %v1792 = vadd.f32 %v1788, %v1790
    %v1793 = vtanh.pop %v1791
    %v1794 = vtanh.pop %v1792
    %v1795 = vmul.f32 %v1784, %v1793
    %v1796 = vmul.f32 %v1786, %v1794
    %v1797 = vpack.c.bf16 %v1796, %v1795
    %1798 = vmatprep.subr.bf16.mxu0 %v734
    %1799 = vmatpush1.bf16.msra.mxu0 %v733
    %1800 = vmatprep.subr.bf16.mxu0 %v738
    %1801 = vmatpush1.bf16.msra.mxu0 %v737
    %1802 = vmatprep.subr.bf16.mxu0 %v742
    %1803 = vmatpush1.bf16.msra.mxu0 %v741
    %1804 = vmatprep.subr.bf16.mxu0 %v746
    %1805 = vmatpush1.bf16.msra.mxu0 %v745
    %1806 = vmatprep.subr.bf16.mxu0 %v750
    %1807 = vmatpush1.bf16.msra.mxu0 %v749
    %1808 = vmatprep.subr.bf16.mxu0 %v754
    %1809 = vmatpush1.bf16.msra.mxu0 %v753
    %1810 = vmatprep.subr.bf16.mxu0 %v758
    %1811 = vmatpush1.bf16.msra.mxu0 %v757
    %1812 = vmatprep.subr.bf16.mxu0 %v762
    %1813 = vmatpush1.bf16.msra.mxu0 %v761
    %1814 = vmatprep.subr.bf16.mxu0 0
    %1815 = vmatpush1.bf16.msra.mxu0 0
    %1816 = vmatprep.subr.bf16.mxu0 0
    %1817 = vmatpush1.bf16.msra.mxu0 0
    %1818 = vmatprep.subr.bf16.mxu0 0
    %1819 = vmatpush1.bf16.msra.mxu0 0
    %1820 = vmatprep.subr.bf16.mxu0 0
    %1821 = vmatpush1.bf16.msra.mxu0 0
    %1822 = vmatprep.subr.bf16.mxu0 0
    %1823 = vmatpush1.bf16.msra.mxu0 0
    %1824 = vmatprep.subr.bf16.mxu0 0
    %1825 = vmatpush1.bf16.msra.mxu0 0
    %1826 = vmatprep.subr.bf16.mxu0 0
    %1827 = vmatpush1.bf16.msra.mxu0 0
    %1828 = vmatprep.subr.bf16.mxu0 0
    %1829 = vmatpush1.bf16.msra.mxu0 0
    %1830 = vmatprep.mubr.bf16.mxu0 0
    %1831 = vmatmul.mubr.bf16.gmra.mrb[0].mxu0 %v1797
    %v1832 = vpop.f32.mrb[0].mxu0
    %v1833 = vadd.f32 0.0, %v1832
    %v1834 = vpop.f32.mrb[0].mxu0
    %v1835 = vadd.f32 0.0, %v1834
    %v1836 = vpop.f32.mrb[0].mxu0
    %v1837 = vadd.f32 0.0, %v1836
    %v1838 = vpop.f32.mrb[0].mxu0
    %v1839 = vadd.f32 0.0, %v1838
    %1840 = vdwg.mxu0
    %1841 = vmatprep.subr.bf16.mxu0 %v736
    %1842 = vmatpush1.bf16.msra.mxu0 %v735
    %1843 = vmatprep.subr.bf16.mxu0 %v740
    %1844 = vmatpush1.bf16.msra.mxu0 %v739
    %1845 = vmatprep.subr.bf16.mxu0 %v744
    %1846 = vmatpush1.bf16.msra.mxu0 %v743
    %1847 = vmatprep.subr.bf16.mxu0 %v748
    %1848 = vmatpush1.bf16.msra.mxu0 %v747
    %1849 = vmatprep.subr.bf16.mxu0 %v752
    %1850 = vmatpush1.bf16.msra.mxu0 %v751
    %1851 = vmatprep.subr.bf16.mxu0 %v756
    %1852 = vmatpush1.bf16.msra.mxu0 %v755
    %1853 = vmatprep.subr.bf16.mxu0 %v760
    %1854 = vmatpush1.bf16.msra.mxu0 %v759
    %1855 = vmatprep.subr.bf16.mxu0 %v764
    %1856 = vmatpush1.bf16.msra.mxu0 %v763
    %1857 = vmatprep.subr.bf16.mxu0 0
    %1858 = vmatpush1.bf16.msra.mxu0 0
    %1859 = vmatprep.subr.bf16.mxu0 0
    %1860 = vmatpush1.bf16.msra.mxu0 0
    %1861 = vmatprep.subr.bf16.mxu0 0
    %1862 = vmatpush1.bf16.msra.mxu0 0
    %1863 = vmatprep.subr.bf16.mxu0 0
    %1864 = vmatpush1.bf16.msra.mxu0 0
    %1865 = vmatprep.subr.bf16.mxu0 0
    %1866 = vmatpush1.bf16.msra.mxu0 0
    %1867 = vmatprep.subr.bf16.mxu0 0
    %1868 = vmatpush1.bf16.msra.mxu0 0
    %1869 = vmatprep.subr.bf16.mxu0 0
    %1870 = vmatpush1.bf16.msra.mxu0 0
    %1871 = vmatprep.subr.bf16.mxu0 0
    %1872 = vmatpush1.bf16.msra.mxu0 0
    %1873 = vmatprep.mubr.bf16.mxu0 0
    %1874 = vmatmul.mubr.bf16.gmra.mrb[0].mxu0 %v1797
    %v1875 = vpop.f32.mrb[0].mxu0
    %v1876 = vadd.f32 0.0, %v1875
    %v1877 = vpop.f32.mrb[0].mxu0
    %v1878 = vadd.f32 0.0, %v1877
    %v1879 = vpop.f32.mrb[0].mxu0
    %v1880 = vadd.f32 0.0, %v1879
    %v1881 = vpop.f32.mrb[0].mxu0
    %v1882 = vadd.f32 0.0, %v1881
    %1883 = vdwg.mxu0
    %v1884 = vadd.f32 %v479, %v1833
    %v1885 = vadd.f32 %v481, %v1835
    %v1886 = vadd.f32 %v592, %v1876
    %v1887 = vadd.f32 %v594, %v1878
    %v1888 = vadd.f32 %v483, %v1837
    %v1889 = vadd.f32 %v485, %v1839
    %v1890 = vadd.f32 %v596, %v1880
    %v1891 = vadd.f32 %v598, %v1882
    %v1892 = vxor.u32 %v1884, 2147483648
    %v1893 = vxor.u32 %v1888, 2147483648
    %v1894 = vmul.f32 %v1892, 1.442695
    %v1895 = vpow.pop %v1894
    %v1896 = vmul.f32 %v1893, 1.442695
    %v1897 = vpow.pop %v1896
    %v1898 = vadd.f32 %v1895, 1.0
    %v1899 = vadd.f32 %v1897, 1.0
    %v1900 = vrcp.pop %v1898
    %v1901 = vmul.f32 1.0, %v1900
    %v1902 = vrcp.pop %v1899
    %v1903 = vmul.f32 1.0, %v1902
    %v1904 = vxor.u32 %v1885, 2147483648
    %v1905 = vxor.u32 %v1889, 2147483648
    %v1906 = vmul.f32 %v1904, 1.442695
    %v1907 = vpow.pop %v1906
    %v1908 = vmul.f32 %v1905, 1.442695
    %v1909 = vpow.pop %v1908
    %v1910 = vadd.f32 %v1907, 1.0
    %v1911 = vadd.f32 %v1909, 1.0
    %v1912 = vrcp.pop %v1910
    %v1913 = vmul.f32 1.0, %v1912
    %v1914 = vrcp.pop %v1911
    %v1915 = vmul.f32 1.0, %v1914
    %v1916 = vtanh.pop %v1886
    %v1917 = vtanh.pop %v1890
    %v1918 = vxor.u32 %v1887, 2147483648
    %v1919 = vxor.u32 %v1891, 2147483648
    %v1920 = vmul.f32 %v1918, 1.442695
    %v1921 = vpow.pop %v1920
    %v1922 = vmul.f32 %v1919, 1.442695
    %v1923 = vpow.pop %v1922
    %v1924 = vadd.f32 %v1921, 1.0
    %v1925 = vadd.f32 %v1923, 1.0
    %v1926 = vrcp.pop %v1924
    %v1927 = vmul.f32 1.0, %v1926
    %v1928 = vrcp.pop %v1925
    %v1929 = vmul.f32 1.0, %v1928
    %v1930 = vmul.f32 %v1913, %v1791
    %v1931 = vmul.f32 %v1915, %v1792
    %v1932 = vmul.f32 %v1901, %v1916
    %v1933 = vmul.f32 %v1903, %v1917
    %v1934 = vadd.f32 %v1930, %v1932
    %v1935 = vadd.f32 %v1931, %v1933
    %v1936 = vtanh.pop %v1934
    %v1937 = vtanh.pop %v1935
    %v1938 = vmul.f32 %v1927, %v1936
    %v1939 = vmul.f32 %v1929, %v1937
    %1940 = vst [vmem:[#allocation2] sm:$0xff] %v1938
    %1941 = vst [vmem:[#allocation2 + $0x8] sm:$0xff] %v1939
    %1942 = vst [vmem:[#allocation3] sm:$0xff] %v1934
    %1943 = vst [vmem:[#allocation3 + $0x8] sm:$0xff] %v1935
    // Predicated region
    $region58: #{tpu_custom_call.1} parent=1 // pred_check
      %p1944 = pneg %p110
    $region59: #{tpu_custom_call.1} parent=1 // pred_check_branch
      %1946 = sbr.rel (%p1944) target = $region61
    $region60: #{tpu_custom_call.1} parent=1 // pred_region
      %v1947 = vld [vmem:[#allocation7] sm:$0xf]
      %v1948 = vld [vmem:[#allocation7 + $0x4] sm:$0xf]
      %v1949 = vpack.c.bf16 %v1939, %v1938
      %v1952 = vunpack.c.l.b16 %v1947
      %v1953 = vunpack.c.l.b16 %v1948
      %v1954 = vpack.c.b16 %v1953, %v1952
      %v1956 = vld [vmem:[#allocation12] sm:$0xff]
      %v1957 = vld [vmem:[#allocation12 + $0x8] sm:$0xff]
      %v1958 = vld [vmem:[#allocation12 + $0x10] sm:$0xff]
      %v1959 = vld [vmem:[#allocation12 + $0x18] sm:$0xff]
      %v1960 = vld [vmem:[#allocation12 + $0x20] sm:$0xff]
      %v1961 = vld [vmem:[#allocation12 + $0x28] sm:$0xff]
      %v1962 = vld [vmem:[#allocation12 + $0x30] sm:$0xff]
      %v1963 = vld [vmem:[#allocation12 + $0x38] sm:$0xff]
      %v1964 = vld [vmem:[#allocation12 + $0x40] sm:$0xff]
      %v1965 = vld [vmem:[#allocation12 + $0x48] sm:$0xff]
      %v1966 = vld [vmem:[#allocation12 + $0x50] sm:$0xff]
      %v1967 = vld [vmem:[#allocation12 + $0x58] sm:$0xff]
      %v1968 = vld [vmem:[#allocation12 + $0x60] sm:$0xff]
      %v1969 = vld [vmem:[#allocation12 + $0x68] sm:$0xff]
      %v1970 = vld [vmem:[#allocation12 + $0x70] sm:$0xff]
      %v1971 = vld [vmem:[#allocation12 + $0x78] sm:$0xff]
      %v1972 = vld [vmem:[#allocation12 + $0x80] sm:$0xff]
      %v1973 = vld [vmem:[#allocation12 + $0x88] sm:$0xff]
      %v1974 = vld [vmem:[#allocation12 + $0x90] sm:$0xff]
      %v1975 = vld [vmem:[#allocation12 + $0x98] sm:$0xff]
      %v1976 = vld [vmem:[#allocation12 + $0xa0] sm:$0xff]
      %v1977 = vld [vmem:[#allocation12 + $0xa8] sm:$0xff]
      %v1978 = vld [vmem:[#allocation12 + $0xb0] sm:$0xff]
      %v1979 = vld [vmem:[#allocation12 + $0xb8] sm:$0xff]
      %v1980 = vld [vmem:[#allocation12 + $0xc0] sm:$0xff]
      %v1981 = vld [vmem:[#allocation12 + $0xc8] sm:$0xff]
      %v1982 = vld [vmem:[#allocation12 + $0xd0] sm:$0xff]
      %v1983 = vld [vmem:[#allocation12 + $0xd8] sm:$0xff]
      %v1984 = vld [vmem:[#allocation12 + $0xe0] sm:$0xff]
      %v1985 = vld [vmem:[#allocation12 + $0xe8] sm:$0xff]
      %v1986 = vld [vmem:[#allocation12 + $0xf0] sm:$0xff]
      %v1987 = vld [vmem:[#allocation12 + $0xf8] sm:$0xff]
      %v1988 = vld [vmem:[#allocation12 + $0x100] sm:$0xff]
      %v1989 = vld [vmem:[#allocation12 + $0x108] sm:$0xff]
      %v1990 = vld [vmem:[#allocation12 + $0x110] sm:$0xff]
      %v1991 = vld [vmem:[#allocation12 + $0x118] sm:$0xff]
      %v1992 = vld [vmem:[#allocation12 + $0x120] sm:$0xff]
      %v1993 = vld [vmem:[#allocation12 + $0x128] sm:$0xff]
      %v1994 = vld [vmem:[#allocation12 + $0x130] sm:$0xff]
      %v1995 = vld [vmem:[#allocation12 + $0x138] sm:$0xff]
      %v1996 = vld [vmem:[#allocation12 + $0x140] sm:$0xff]
      %v1997 = vld [vmem:[#allocation12 + $0x148] sm:$0xff]
      %v1998 = vld [vmem:[#allocation12 + $0x150] sm:$0xff]
      %v1999 = vld [vmem:[#allocation12 + $0x158] sm:$0xff]
      %v2000 = vld [vmem:[#allocation12 + $0x160] sm:$0xff]
      %v2001 = vld [vmem:[#allocation12 + $0x168] sm:$0xff]
      %v2002 = vld [vmem:[#allocation12 + $0x170] sm:$0xff]
      %v2003 = vld [vmem:[#allocation12 + $0x178] sm:$0xff]
      %v2004 = vld [vmem:[#allocation12 + $0x180] sm:$0xff]
      %v2005 = vld [vmem:[#allocation12 + $0x188] sm:$0xff]
      %v2006 = vld [vmem:[#allocation12 + $0x190] sm:$0xff]
      %v2007 = vld [vmem:[#allocation12 + $0x198] sm:$0xff]
      %v2008 = vld [vmem:[#allocation12 + $0x1a0] sm:$0xff]
      %v2009 = vld [vmem:[#allocation12 + $0x1a8] sm:$0xff]
      %v2010 = vld [vmem:[#allocation12 + $0x1b0] sm:$0xff]
      %v2011 = vld [vmem:[#allocation12 + $0x1b8] sm:$0xff]
      %v2012 = vld [vmem:[#allocation12 + $0x1c0] sm:$0xff]
      %v2013 = vld [vmem:[#allocation12 + $0x1c8] sm:$0xff]
      %v2014 = vld [vmem:[#allocation12 + $0x1d0] sm:$0xff]
      %v2015 = vld [vmem:[#allocation12 + $0x1d8] sm:$0xff]
      %v2016 = vld [vmem:[#allocation12 + $0x1e0] sm:$0xff]
      %v2017 = vld [vmem:[#allocation12 + $0x1e8] sm:$0xff]
      %v2018 = vld [vmem:[#allocation12 + $0x1f0] sm:$0xff]
      %v2019 = vld [vmem:[#allocation12 + $0x1f8] sm:$0xff]
      %v2084 = vunpack.c.l.b16 %v1956
      %v2085 = vunpack.c.h.b16 %v1956
      %v2086 = vunpack.c.l.b16 %v1957
      %v2087 = vunpack.c.h.b16 %v1957
      %v2088 = vunpack.c.l.b16 %v1958
      %v2089 = vunpack.c.h.b16 %v1958
      %v2090 = vunpack.c.l.b16 %v1959
      %v2091 = vunpack.c.h.b16 %v1959
      %v2092 = vunpack.c.l.b16 %v1960
      %v2093 = vunpack.c.h.b16 %v1960
      %v2094 = vunpack.c.l.b16 %v1961
      %v2095 = vunpack.c.h.b16 %v1961
      %v2096 = vunpack.c.l.b16 %v1962
      %v2097 = vunpack.c.h.b16 %v1962
      %v2098 = vunpack.c.l.b16 %v1963
      %v2099 = vunpack.c.h.b16 %v1963
      %v2100 = vunpack.c.l.b16 %v1964
      %v2101 = vunpack.c.h.b16 %v1964
      %v2102 = vunpack.c.l.b16 %v1965
      %v2103 = vunpack.c.h.b16 %v1965
      %v2104 = vunpack.c.l.b16 %v1966
      %v2105 = vunpack.c.h.b16 %v1966
      %v2106 = vunpack.c.l.b16 %v1967
      %v2107 = vunpack.c.h.b16 %v1967
      %v2108 = vunpack.c.l.b16 %v1968
      %v2109 = vunpack.c.h.b16 %v1968
      %v2110 = vunpack.c.l.b16 %v1969
      %v2111 = vunpack.c.h.b16 %v1969
      %v2112 = vunpack.c.l.b16 %v1970
      %v2113 = vunpack.c.h.b16 %v1970
      %v2114 = vunpack.c.l.b16 %v1971
      %v2115 = vunpack.c.h.b16 %v1971
      %v2116 = vunpack.c.l.b16 %v1972
      %v2117 = vunpack.c.h.b16 %v1972
      %v2118 = vunpack.c.l.b16 %v1973
      %v2119 = vunpack.c.h.b16 %v1973
      %v2120 = vunpack.c.l.b16 %v1974
      %v2121 = vunpack.c.h.b16 %v1974
      %v2122 = vunpack.c.l.b16 %v1975
      %v2123 = vunpack.c.h.b16 %v1975
      %v2124 = vunpack.c.l.b16 %v1976
      %v2125 = vunpack.c.h.b16 %v1976
      %v2126 = vunpack.c.l.b16 %v1977
      %v2127 = vunpack.c.h.b16 %v1977
      %v2128 = vunpack.c.l.b16 %v1978
      %v2129 = vunpack.c.h.b16 %v1978
      %v2130 = vunpack.c.l.b16 %v1979
      %v2131 = vunpack.c.h.b16 %v1979
      %v2132 = vunpack.c.l.b16 %v1980
      %v2133 = vunpack.c.h.b16 %v1980
      %v2134 = vunpack.c.l.b16 %v1981
      %v2135 = vunpack.c.h.b16 %v1981
      %v2136 = vunpack.c.l.b16 %v1982
      %v2137 = vunpack.c.h.b16 %v1982
      %v2138 = vunpack.c.l.b16 %v1983
      %v2139 = vunpack.c.h.b16 %v1983
      %v2140 = vunpack.c.l.b16 %v1984
      %v2141 = vunpack.c.h.b16 %v1984
      %v2142 = vunpack.c.l.b16 %v1985
      %v2143 = vunpack.c.h.b16 %v1985
      %v2144 = vunpack.c.l.b16 %v1986
      %v2145 = vunpack.c.h.b16 %v1986
      %v2146 = vunpack.c.l.b16 %v1987
      %v2147 = vunpack.c.h.b16 %v1987
      %v2148 = vunpack.c.l.b16 %v1988
      %v2149 = vunpack.c.h.b16 %v1988
      %v2150 = vunpack.c.l.b16 %v1989
      %v2151 = vunpack.c.h.b16 %v1989
      %v2152 = vunpack.c.l.b16 %v1990
      %v2153 = vunpack.c.h.b16 %v1990
      %v2154 = vunpack.c.l.b16 %v1991
      %v2155 = vunpack.c.h.b16 %v1991
      %v2156 = vunpack.c.l.b16 %v1992
      %v2157 = vunpack.c.h.b16 %v1992
      %v2158 = vunpack.c.l.b16 %v1993
      %v2159 = vunpack.c.h.b16 %v1993
      %v2160 = vunpack.c.l.b16 %v1994
      %v2161 = vunpack.c.h.b16 %v1994
      %v2162 = vunpack.c.l.b16 %v1995
      %v2163 = vunpack.c.h.b16 %v1995
      %v2164 = vunpack.c.l.b16 %v1996
      %v2165 = vunpack.c.h.b16 %v1996
      %v2166 = vunpack.c.l.b16 %v1997
      %v2167 = vunpack.c.h.b16 %v1997
      %v2168 = vunpack.c.l.b16 %v1998
      %v2169 = vunpack.c.h.b16 %v1998
      %v2170 = vunpack.c.l.b16 %v1999
      %v2171 = vunpack.c.h.b16 %v1999
      %v2172 = vunpack.c.l.b16 %v2000
      %v2173 = vunpack.c.h.b16 %v2000
      %v2174 = vunpack.c.l.b16 %v2001
      %v2175 = vunpack.c.h.b16 %v2001
      %v2176 = vunpack.c.l.b16 %v2002
      %v2177 = vunpack.c.h.b16 %v2002
      %v2178 = vunpack.c.l.b16 %v2003
      %v2179 = vunpack.c.h.b16 %v2003
      %v2180 = vunpack.c.l.b16 %v2004
      %v2181 = vunpack.c.h.b16 %v2004
      %v2182 = vunpack.c.l.b16 %v2005
      %v2183 = vunpack.c.h.b16 %v2005
      %v2184 = vunpack.c.l.b16 %v2006
      %v2185 = vunpack.c.h.b16 %v2006
      %v2186 = vunpack.c.l.b16 %v2007
      %v2187 = vunpack.c.h.b16 %v2007
      %v2188 = vunpack.c.l.b16 %v2008
      %v2189 = vunpack.c.h.b16 %v2008
      %v2190 = vunpack.c.l.b16 %v2009
      %v2191 = vunpack.c.h.b16 %v2009
      %v2192 = vunpack.c.l.b16 %v2010
      %v2193 = vunpack.c.h.b16 %v2010
      %v2194 = vunpack.c.l.b16 %v2011
      %v2195 = vunpack.c.h.b16 %v2011
      %v2196 = vunpack.c.l.b16 %v2012
      %v2197 = vunpack.c.h.b16 %v2012
      %v2198 = vunpack.c.l.b16 %v2013
      %v2199 = vunpack.c.h.b16 %v2013
      %v2200 = vunpack.c.l.b16 %v2014
      %v2201 = vunpack.c.h.b16 %v2014
      %v2202 = vunpack.c.l.b16 %v2015
      %v2203 = vunpack.c.h.b16 %v2015
      %v2204 = vunpack.c.l.b16 %v2016
      %v2205 = vunpack.c.h.b16 %v2016
      %v2206 = vunpack.c.l.b16 %v2017
      %v2207 = vunpack.c.h.b16 %v2017
      %v2208 = vunpack.c.l.b16 %v2018
      %v2209 = vunpack.c.h.b16 %v2018
      %v2210 = vunpack.c.l.b16 %v2019
      %v2211 = vunpack.c.h.b16 %v2019
      %v2212 = vpack.c.b16 %v2088, %v2084
      %v2213 = vpack.c.b16 %v2089, %v2085
      %v2214 = vpack.c.b16 %v2090, %v2086
      %v2215 = vpack.c.b16 %v2091, %v2087
      %v2216 = vpack.c.b16 %v2096, %v2092
      %v2217 = vpack.c.b16 %v2097, %v2093
      %v2218 = vpack.c.b16 %v2098, %v2094
      %v2219 = vpack.c.b16 %v2099, %v2095
      %v2220 = vpack.c.b16 %v2104, %v2100
      %v2221 = vpack.c.b16 %v2105, %v2101
      %v2222 = vpack.c.b16 %v2106, %v2102
      %v2223 = vpack.c.b16 %v2107, %v2103
      %v2224 = vpack.c.b16 %v2112, %v2108
      %v2225 = vpack.c.b16 %v2113, %v2109
      %v2226 = vpack.c.b16 %v2114, %v2110
      %v2227 = vpack.c.b16 %v2115, %v2111
      %v2228 = vpack.c.b16 %v2120, %v2116
      %v2229 = vpack.c.b16 %v2121, %v2117
      %v2230 = vpack.c.b16 %v2122, %v2118
      %v2231 = vpack.c.b16 %v2123, %v2119
      %v2232 = vpack.c.b16 %v2128, %v2124
      %v2233 = vpack.c.b16 %v2129, %v2125
      %v2234 = vpack.c.b16 %v2130, %v2126
      %v2235 = vpack.c.b16 %v2131, %v2127
      %v2236 = vpack.c.b16 %v2136, %v2132
      %v2237 = vpack.c.b16 %v2137, %v2133
      %v2238 = vpack.c.b16 %v2138, %v2134
      %v2239 = vpack.c.b16 %v2139, %v2135
      %v2240 = vpack.c.b16 %v2144, %v2140
      %v2241 = vpack.c.b16 %v2145, %v2141
      %v2242 = vpack.c.b16 %v2146, %v2142
      %v2243 = vpack.c.b16 %v2147, %v2143
      %v2244 = vpack.c.b16 %v2152, %v2148
      %v2245 = vpack.c.b16 %v2153, %v2149
      %v2246 = vpack.c.b16 %v2154, %v2150
      %v2247 = vpack.c.b16 %v2155, %v2151
      %v2248 = vpack.c.b16 %v2160, %v2156
      %v2249 = vpack.c.b16 %v2161, %v2157
      %v2250 = vpack.c.b16 %v2162, %v2158
      %v2251 = vpack.c.b16 %v2163, %v2159
      %v2252 = vpack.c.b16 %v2168, %v2164
      %v2253 = vpack.c.b16 %v2169, %v2165
      %v2254 = vpack.c.b16 %v2170, %v2166
      %v2255 = vpack.c.b16 %v2171, %v2167
      %v2256 = vpack.c.b16 %v2176, %v2172
      %v2257 = vpack.c.b16 %v2177, %v2173
      %v2258 = vpack.c.b16 %v2178, %v2174
      %v2259 = vpack.c.b16 %v2179, %v2175
      %v2260 = vpack.c.b16 %v2184, %v2180
      %v2261 = vpack.c.b16 %v2185, %v2181
      %v2262 = vpack.c.b16 %v2186, %v2182
      %v2263 = vpack.c.b16 %v2187, %v2183
      %v2264 = vpack.c.b16 %v2192, %v2188
      %v2265 = vpack.c.b16 %v2193, %v2189
      %v2266 = vpack.c.b16 %v2194, %v2190
      %v2267 = vpack.c.b16 %v2195, %v2191
      %v2268 = vpack.c.b16 %v2200, %v2196
      %v2269 = vpack.c.b16 %v2201, %v2197
      %v2270 = vpack.c.b16 %v2202, %v2198
      %v2271 = vpack.c.b16 %v2203, %v2199
      %v2272 = vpack.c.b16 %v2208, %v2204
      %v2273 = vpack.c.b16 %v2209, %v2205
      %v2274 = vpack.c.b16 %v2210, %v2206
      %v2275 = vpack.c.b16 %v2211, %v2207
      %2340 = vmatprep.subr.bf16.mxu0 %v2213
      %2341 = vmatpush1.bf16.msra.mxu0 %v2212
      %2342 = vmatprep.subr.bf16.mxu0 %v2217
      %2343 = vmatpush1.bf16.msra.mxu0 %v2216
      %2344 = vmatprep.subr.bf16.mxu0 %v2221
      %2345 = vmatpush1.bf16.msra.mxu0 %v2220
      %2346 = vmatprep.subr.bf16.mxu0 %v2225
      %2347 = vmatpush1.bf16.msra.mxu0 %v2224
      %2348 = vmatprep.subr.bf16.mxu0 %v2229
      %2349 = vmatpush1.bf16.msra.mxu0 %v2228
      %2350 = vmatprep.subr.bf16.mxu0 %v2233
      %2351 = vmatpush1.bf16.msra.mxu0 %v2232
      %2352 = vmatprep.subr.bf16.mxu0 %v2237
      %2353 = vmatpush1.bf16.msra.mxu0 %v2236
      %2354 = vmatprep.subr.bf16.mxu0 %v2241
      %2355 = vmatpush1.bf16.msra.mxu0 %v2240
      %2356 = vmatprep.subr.bf16.mxu0 %v2245
      %2357 = vmatpush1.bf16.msra.mxu0 %v2244
      %2358 = vmatprep.subr.bf16.mxu0 %v2249
      %2359 = vmatpush1.bf16.msra.mxu0 %v2248
      %2360 = vmatprep.subr.bf16.mxu0 %v2253
      %2361 = vmatpush1.bf16.msra.mxu0 %v2252
      %2362 = vmatprep.subr.bf16.mxu0 %v2257
      %2363 = vmatpush1.bf16.msra.mxu0 %v2256
      %2364 = vmatprep.subr.bf16.mxu0 %v2261
      %2365 = vmatpush1.bf16.msra.mxu0 %v2260
      %2366 = vmatprep.subr.bf16.mxu0 %v2265
      %2367 = vmatpush1.bf16.msra.mxu0 %v2264
      %2368 = vmatprep.subr.bf16.mxu0 %v2269
      %2369 = vmatpush1.bf16.msra.mxu0 %v2268
      %2370 = vmatprep.subr.bf16.mxu0 %v2273
      %2371 = vmatpush1.bf16.msra.mxu0 %v2272
      %2372 = vmatprep.mubr.bf16.mxu0 %v1949
      %2373 = vmatmul.mubr.bf16.gmra.mrb[0].mxu0 %v1954
      %v2374 = vpop.f32.mrb[0].mxu0
      %v2375 = vadd.f32 0.0, %v2374
      %v2376 = vpop.f32.mrb[0].mxu0
      %v2377 = vadd.f32 0.0, %v2376
      %v2378 = vpop.f32.mrb[0].mxu0
      %v2379 = vadd.f32 0.0, %v2378
      %v2380 = vpop.f32.mrb[0].mxu0
      %v2381 = vadd.f32 0.0, %v2380
      %2382 = vdwg.mxu0
      %2383 = vmatprep.subr.bf16.mxu0 %v2215
      %2384 = vmatpush1.bf16.msra.mxu0 %v2214
      %2385 = vmatprep.subr.bf16.mxu0 %v2219
      %2386 = vmatpush1.bf16.msra.mxu0 %v2218
      %2387 = vmatprep.subr.bf16.mxu0 %v2223
      %2388 = vmatpush1.bf16.msra.mxu0 %v2222
      %2389 = vmatprep.subr.bf16.mxu0 %v2227
      %2390 = vmatpush1.bf16.msra.mxu0 %v2226
      %2391 = vmatprep.subr.bf16.mxu0 %v2231
      %2392 = vmatpush1.bf16.msra.mxu0 %v2230
      %2393 = vmatprep.subr.bf16.mxu0 %v2235
      %2394 = vmatpush1.bf16.msra.mxu0 %v2234
      %2395 = vmatprep.subr.bf16.mxu0 %v2239
      %2396 = vmatpush1.bf16.msra.mxu0 %v2238
      %2397 = vmatprep.subr.bf16.mxu0 %v2243
      %2398 = vmatpush1.bf16.msra.mxu0 %v2242
      %2399 = vmatprep.subr.bf16.mxu0 %v2247
      %2400 = vmatpush1.bf16.msra.mxu0 %v2246
      %2401 = vmatprep.subr.bf16.mxu0 %v2251
      %2402 = vmatpush1.bf16.msra.mxu0 %v2250
      %2403 = vmatprep.subr.bf16.mxu0 %v2255
      %2404 = vmatpush1.bf16.msra.mxu0 %v2254
      %2405 = vmatprep.subr.bf16.mxu0 %v2259
      %2406 = vmatpush1.bf16.msra.mxu0 %v2258
      %2407 = vmatprep.subr.bf16.mxu0 %v2263
      %2408 = vmatpush1.bf16.msra.mxu0 %v2262
      %2409 = vmatprep.subr.bf16.mxu0 %v2267
      %2410 = vmatpush1.bf16.msra.mxu0 %v2266
      %2411 = vmatprep.subr.bf16.mxu0 %v2271
      %2412 = vmatpush1.bf16.msra.mxu0 %v2270
      %2413 = vmatprep.subr.bf16.mxu0 %v2275
      %2414 = vmatpush1.bf16.msra.mxu0 %v2274
      %2415 = vmatprep.mubr.bf16.mxu0 %v1949
      %2416 = vmatmul.mubr.bf16.gmra.mrb[0].mxu0 %v1954
      %v2417 = vpop.f32.mrb[0].mxu0
      %v2418 = vadd.f32 0.0, %v2417
      %v2419 = vpop.f32.mrb[0].mxu0
      %v2420 = vadd.f32 0.0, %v2419
      %v2421 = vpop.f32.mrb[0].mxu0
      %v2422 = vadd.f32 0.0, %v2421
      %v2423 = vpop.f32.mrb[0].mxu0
      %v2424 = vadd.f32 0.0, %v2423
      %2425 = vdwg.mxu0
      %v2426 = vxor.u32 %v2375, 2147483648
      %v2427 = vxor.u32 %v2379, 2147483648
      %v2428 = vmul.f32 %v2426, 1.442695
      %v2429 = vpow.pop %v2428
      %v2430 = vmul.f32 %v2427, 1.442695
      %v2431 = vpow.pop %v2430
      %v2432 = vadd.f32 %v2429, 1.0
      %v2433 = vadd.f32 %v2431, 1.0
      %v2434 = vrcp.pop %v2432
      %v2435 = vmul.f32 1.0, %v2434
      %v2436 = vrcp.pop %v2433
      %v2437 = vmul.f32 1.0, %v2436
      %v2438 = vxor.u32 %v2377, 2147483648
      %v2439 = vxor.u32 %v2381, 2147483648
      %v2440 = vmul.f32 %v2438, 1.442695
      %v2441 = vpow.pop %v2440
      %v2442 = vmul.f32 %v2439, 1.442695
      %v2443 = vpow.pop %v2442
      %v2444 = vadd.f32 %v2441, 1.0
      %v2445 = vadd.f32 %v2443, 1.0
      %v2446 = vrcp.pop %v2444
      %v2447 = vmul.f32 1.0, %v2446
      %v2448 = vrcp.pop %v2445
      %v2449 = vmul.f32 1.0, %v2448
      %v2450 = vtanh.pop %v2418
      %v2451 = vtanh.pop %v2422
      %v2452 = vxor.u32 %v2420, 2147483648
      %v2453 = vxor.u32 %v2424, 2147483648
      %v2454 = vmul.f32 %v2452, 1.442695
      %v2455 = vpow.pop %v2454
      %v2456 = vmul.f32 %v2453, 1.442695
      %v2457 = vpow.pop %v2456
      %v2458 = vadd.f32 %v2455, 1.0
      %v2459 = vadd.f32 %v2457, 1.0
      %v2460 = vrcp.pop %v2458
      %v2461 = vmul.f32 1.0, %v2460
      %v2462 = vrcp.pop %v2459
      %v2463 = vmul.f32 1.0, %v2462
      %v2464 = vmul.f32 %v2447, %v1934
      %v2465 = vmul.f32 %v2449, %v1935
      %v2466 = vmul.f32 %v2435, %v2450
      %v2467 = vmul.f32 %v2437, %v2451
      %v2468 = vadd.f32 %v2464, %v2466
      %v2469 = vadd.f32 %v2465, %v2467
      %v2470 = vtanh.pop %v2468
      %v2471 = vtanh.pop %v2469
      %v2472 = vmul.f32 %v2461, %v2470
      %v2473 = vmul.f32 %v2463, %v2471
      %v2474 = vpack.c.bf16 %v2473, %v2472
      %v2475 = vld [vmem:[#allocation13] sm:$0xf]
      %v2476 = vld [vmem:[#allocation13 + $0x4] sm:$0xf]
      %v2477 = vld [vmem:[#allocation13 + $0x8] sm:$0xf]
      %v2478 = vld [vmem:[#allocation13 + $0xc] sm:$0xf]
      %v2479 = vld [vmem:[#allocation13 + $0x10] sm:$0xf]
      %v2480 = vld [vmem:[#allocation13 + $0x14] sm:$0xf]
      %v2481 = vld [vmem:[#allocation13 + $0x18] sm:$0xf]
      %v2482 = vld [vmem:[#allocation13 + $0x1c] sm:$0xf]
      %v2483 = vld [vmem:[#allocation13 + $0x20] sm:$0xf]
      %v2484 = vld [vmem:[#allocation13 + $0x24] sm:$0xf]
      %v2485 = vld [vmem:[#allocation13 + $0x28] sm:$0xf]
      %v2486 = vld [vmem:[#allocation13 + $0x2c] sm:$0xf]
      %v2487 = vld [vmem:[#allocation13 + $0x30] sm:$0xf]
      %v2488 = vld [vmem:[#allocation13 + $0x34] sm:$0xf]
      %v2489 = vld [vmem:[#allocation13 + $0x38] sm:$0xf]
      %v2490 = vld [vmem:[#allocation13 + $0x3c] sm:$0xf]
      %v2491 = vld [vmem:[%s6] sm:$0x1]
      %v2493 = vlaneseq
      %v2494 = vshrl.u32 %v2493, 7
      %v2495 = vsub.s32 0, %v2494
      %v2496 = vrot.slane %v2491, %v2495
      %v2514 = vunpack.c.l.b16 %v2475
      %v2515 = vunpack.c.l.b16 %v2476
      %v2516 = vunpack.c.l.b16 %v2477
      %v2517 = vunpack.c.l.b16 %v2478
      %v2518 = vunpack.c.l.b16 %v2479
      %v2519 = vunpack.c.l.b16 %v2480
      %v2520 = vunpack.c.l.b16 %v2481
      %v2521 = vunpack.c.l.b16 %v2482
      %v2522 = vunpack.c.l.b16 %v2483
      %v2523 = vunpack.c.l.b16 %v2484
      %v2524 = vunpack.c.l.b16 %v2485
      %v2525 = vunpack.c.l.b16 %v2486
      %v2526 = vunpack.c.l.b16 %v2487
      %v2527 = vunpack.c.l.b16 %v2488
      %v2528 = vunpack.c.l.b16 %v2489
      %v2529 = vunpack.c.l.b16 %v2490
      %v2530 = vpack.c.b16 %v2515, %v2514
      %v2531 = vpack.c.b16 %v2517, %v2516
      %v2532 = vpack.c.b16 %v2519, %v2518
      %v2533 = vpack.c.b16 %v2521, %v2520
      %v2534 = vpack.c.b16 %v2523, %v2522
      %v2535 = vpack.c.b16 %v2525, %v2524
      %v2536 = vpack.c.b16 %v2527, %v2526
      %v2537 = vpack.c.b16 %v2529, %v2528
      %2546 = vmatprep.subr.bf16.mxu0 0
      %2547 = vmatpush1.bf16.msra.mxu0 %v2530
      %2548 = vmatprep.subr.bf16.mxu0 0
      %2549 = vmatpush1.bf16.msra.mxu0 %v2531
      %2550 = vmatprep.subr.bf16.mxu0 0
      %2551 = vmatpush1.bf16.msra.mxu0 %v2532
      %2552 = vmatprep.subr.bf16.mxu0 0
      %2553 = vmatpush1.bf16.msra.mxu0 %v2533
      %2554 = vmatprep.subr.bf16.mxu0 0
      %2555 = vmatpush1.bf16.msra.mxu0 %v2534
      %2556 = vmatprep.subr.bf16.mxu0 0
      %2557 = vmatpush1.bf16.msra.mxu0 %v2535
      %2558 = vmatprep.subr.bf16.mxu0 0
      %2559 = vmatpush1.bf16.msra.mxu0 %v2536
      %2560 = vmatprep.subr.bf16.mxu0 0
      %2561 = vmatpush1.bf16.msra.mxu0 %v2537
      %2562 = vmatprep.subr.bf16.mxu0 0
      %2563 = vmatpush1.bf16.msra.mxu0 0
      %2564 = vmatprep.subr.bf16.mxu0 0
      %2565 = vmatpush1.bf16.msra.mxu0 0
      %2566 = vmatprep.subr.bf16.mxu0 0
      %2567 = vmatpush1.bf16.msra.mxu0 0
      %2568 = vmatprep.subr.bf16.mxu0 0
      %2569 = vmatpush1.bf16.msra.mxu0 0
      %2570 = vmatprep.subr.bf16.mxu0 0
      %2571 = vmatpush1.bf16.msra.mxu0 0
      %2572 = vmatprep.subr.bf16.mxu0 0
      %2573 = vmatpush1.bf16.msra.mxu0 0
      %2574 = vmatprep.subr.bf16.mxu0 0
      %2575 = vmatpush1.bf16.msra.mxu0 0
      %2576 = vmatprep.subr.bf16.mxu0 0
      %2577 = vmatpush1.bf16.msra.mxu0 0
      %2578 = vmatprep.mubr.bf16.mxu0 0
      %2579 = vmatmul.mubr.bf16.gmra.mrb[0].mxu0 %v2474
      %v2580 = vpop.f32.mrb[0].mxu0
      %v2581 = vadd.f32 %v2496, %v2580
      %v2582 = vpop.f32.mrb[0].mxu0
      %v2583 = vpop.f32.mrb[0].mxu0
      %v2584 = vadd.f32 %v2496, %v2583
      %v2585 = vpop.f32.mrb[0].mxu0
      %2586 = vdwg.mxu0
      %2587 = vst [vmem:[#allocation15] sm:$0xff] %v2581
      %2588 = vst [vmem:[#allocation15 + $0x8] sm:$0xff] %v2584
    $region61: #{tpu_custom_call.1} parent=1 // pred_fallthru
      _
    // Predicated region
    $region62: #{tpu_custom_call.1} parent=1 // pred_check
      _
    $region63: #{tpu_custom_call.1} parent=1 // pred_check_branch
      %2590 = sbr.rel (0) target = $region65
    $region64: #{tpu_custom_call.1} parent=1 // pred_region
      %s2592 = ssub.s32 256, 256
      %2593 = vsyncadd [#allocation6], %s2592
      %s2594 = sshll.u32 [#allocation15], 4
      %s2595 = int_to_ptr.vmem [resolvable:$true] %s2594
      %2600 = dma.vmem_to_hbm [thread:$0]  %s2595, 256, %s7, [#allocation6], 128, 128, 8
    $region65: #{tpu_custom_call.1} parent=1 // pred_fallthru
      _
    // Predicated region
    $region66: #{tpu_custom_call.1} parent=1 // pred_check
      _
    $region67: #{tpu_custom_call.1} parent=1 // pred_check_branch
      %2602 = sbr.rel (0) target = $region69
    $region68: #{tpu_custom_call.1} parent=1 // pred_region
      %2603 = dma.done [#allocation6], 256
    $region69: #{tpu_custom_call.1} parent=1 // pred_fallthru
      _
    %2604 = vsyncpa [#allocation5], 1
    %2605 = vsyncpa [#allocation8], 1
    %2606 = vsyncpa [#allocation11], 1
    %2607 = vsyncpa [#allocation14], 1
    %2608 = vsyncpa [#allocation6], 1

</llo_original>
